<compile_context>
chip_gen: v6e
topology: v6e:2x2x1
jax: 0.10.0
libtpu: 0.0.40
codegen_flags: <defaults>
</compile_context>

<pallas_src>
import functools
import math

import jax
import jax.numpy as jnp
from jax.experimental import pallas as pl
from jax.experimental.pallas import tpu as pltpu

D_MODEL = 32
NHEAD = 4
DIM_FF = 64
SEQ = 8
BATCH = 2
LN_EPS = 1e-5
LANES = 128


def _mod(x, m):
    # Power-of-two moduli become a bitwise AND (avoids vector integer rem).
    if m & (m - 1) == 0:
        return jnp.bitwise_and(x, m - 1)
    return x % m


def _encoder_layer_kernel(x_ref, pos_ref, slab_ref, o_ref, *, nhead, dff, bias_row):
    x = x_ref[...].astype(jnp.float32)      # (S, B, D)
    pos = pos_ref[...].astype(jnp.float32)  # (S, B, D)
    S, B, D = x.shape
    N = S * B
    H = nhead
    dh = D // H

    xf = x.reshape(N, D)
    posf = pos.reshape(N, D)

    # ---- static sub-views of the single packed parameter slab --------------
    wqkv = slab_ref[0:D, 0:3 * D]                 # (D, 3D)  [Wq*scale | Wk | Wv]^T
    wot = slab_ref[D:2 * D, 0:D]                  # (D, D)
    w1t = slab_ref[2 * D:3 * D, 0:dff]            # (D, dff)
    w2t = slab_ref[3 * D:3 * D + dff, 0:D]        # (dff, D)
    bias = slab_ref[bias_row:bias_row + 8, :]     # (8, 128) bias / LN block
    bqkv = bias[0:1, 0:3 * D]
    bo = bias[1:2, 0:D]
    b1 = bias[2:3, 0:dff]
    b2 = bias[3:4, 0:D]
    g1 = bias[4:5, 0:D]
    beta1 = bias[5:6, 0:D]
    g2 = bias[6:7, 0:D]
    beta2 = bias[7:8, 0:D]

    # ---- fused Q/K/V projection: ONE matmul on stacked [x; pos] rows -------
    stacked = jnp.concatenate([xf, posf], axis=0)                       # (2N, D)
    proj = jnp.dot(stacked, wqkv, preferred_element_type=jnp.float32)   # (2N, 3D)
    px = proj[0:N, :] + bqkv       # src-row projections (+ all biases)
    pp = proj[N:2 * N, :]          # pos-row projections (no bias)
    q = px[:, 0:D] + pp[:, 0:D]            # (N, D), already scaled by 1/sqrt(dh)
    k = px[:, D:2 * D] + pp[:, D:2 * D]    # (N, D)
    v = px[:, 2 * D:3 * D]                 # (N, D)  value uses src only

    # ---- per-head lane masks generated in-kernel (no division needed) ------
    lane = jax.lax.broadcasted_iota(jnp.int32, (H, D), 1)
    hid = jax.lax.broadcasted_iota(jnp.int32, (H, D), 0)
    hmasks = ((lane >= hid * dh) & (lane < (hid + 1) * dh)).astype(jnp.float32)  # (H, D)

    # ---- stacked-head attention: 1 score matmul, 1 softmax, 1 weighting ----
    qh = (q[None, :, :] * hmasks[:, None, :]).reshape(H * N, D)
    s = jax.lax.dot_general(qh, k, (((1,), (1,)), ((), ())),
                            preferred_element_type=jnp.float32)          # (H*N, N)
    r = jax.lax.broadcasted_iota(jnp.int32, (H * N, N), 0)
    c = jax.lax.broadcasted_iota(jnp.int32, (H * N, N), 1)
    # Row n of the flattened (S*B) view belongs to batch n % B (holds for the
    # stacked H*N rows too, since N is a multiple of B).
    s = jnp.where(_mod(r, B) == _mod(c, B), s, -1e9)
    s = s - jnp.max(s, axis=-1, keepdims=True)
    p = jnp.exp(s)
    p = p * pl.reciprocal(jnp.sum(p, axis=-1, keepdims=True), approx=True)
    oh = jnp.dot(p, v, preferred_element_type=jnp.float32)               # (H*N, D)
    attn = jnp.sum(oh.reshape(H, N, D) * hmasks[:, None, :], axis=0)     # (N, D)

    # ---- output projection + residual + LayerNorm1 --------------------------
    y = xf + jnp.dot(attn, wot, preferred_element_type=jnp.float32) + bo
    mu = jnp.mean(y, axis=-1, keepdims=True)
    var = jnp.mean((y - mu) ** 2, axis=-1, keepdims=True)
    y = (y - mu) * jax.lax.rsqrt(var + LN_EPS) * g1 + beta1

    # ---- FFN + residual + LayerNorm2 ----------------------------------------
    h1 = jnp.maximum(jnp.dot(y, w1t, preferred_element_type=jnp.float32) + b1, 0.0)
    z = y + jnp.dot(h1, w2t, preferred_element_type=jnp.float32) + b2
    mu2 = jnp.mean(z, axis=-1, keepdims=True)
    var2 = jnp.mean((z - mu2) ** 2, axis=-1, keepdims=True)
    z = (z - mu2) * jax.lax.rsqrt(var2 + LN_EPS) * g2 + beta2

    o_ref[...] = z.reshape(S, B, D).astype(o_ref.dtype)


def prepare_params(params, *, nhead=NHEAD):
    """ONE-TIME packing (off the per-call hot path): transpose weights, fuse
    Wq/Wk/Wv, fold the 1/sqrt(dh) scale into the q slice, and stack every
    weight/bias/LN param into a single lane-padded (rows, 128) f32 slab."""
    f32 = jnp.float32
    D = params["wq"].shape[0]
    dff = params["w1"].shape[0]
    scale = 1.0 / math.sqrt(D // nhead)

    wqkv = jnp.concatenate(
        [params["wq"].T * scale, params["wk"].T, params["wv"].T], axis=1)   # (D, 3D)
    bqkv = jnp.concatenate(
        [params["bq"] * scale, params["bk"], params["bv"]], axis=1)         # (1, 3D)

    w_rows = 3 * D + dff
    bias_row = (w_rows + 7) // 8 * 8          # 8-sublane aligned bias block
    rows = bias_row + 8

    slab = jnp.zeros((rows, LANES), f32)
    slab = slab.at[0:D, 0:3 * D].set(wqkv.astype(f32))
    slab = slab.at[D:2 * D, 0:D].set(params["wo"].T.astype(f32))
    slab = slab.at[2 * D:3 * D, 0:dff].set(params["w1"].T.astype(f32))
    slab = slab.at[3 * D:3 * D + dff, 0:D].set(params["w2"].T.astype(f32))
    slab = slab.at[bias_row + 0, 0:3 * D].set(bqkv[0].astype(f32))
    slab = slab.at[bias_row + 1, 0:D].set(params["bo"][0].astype(f32))
    slab = slab.at[bias_row + 2, 0:dff].set(params["b1"][0].astype(f32))
    slab = slab.at[bias_row + 3, 0:D].set(params["b2"][0].astype(f32))
    slab = slab.at[bias_row + 4, 0:D].set(params["ln1_g"][0].astype(f32))
    slab = slab.at[bias_row + 5, 0:D].set(params["ln1_b"][0].astype(f32))
    slab = slab.at[bias_row + 6, 0:D].set(params["ln2_g"][0].astype(f32))
    slab = slab.at[bias_row + 7, 0:D].set(params["ln2_b"][0].astype(f32))
    return slab


def transformer_encoder_layer(src, pos, packed_params, *, nhead=NHEAD, dff=DIM_FF):
    """src, pos: (S, B, D) float32 (PyTorch seq-first convention).
    packed_params: output of prepare_params()."""
    S, B, D = src.shape
    bias_row = packed_params.shape[0] - 8
    kern = functools.partial(_encoder_layer_kernel,
                             nhead=nhead, dff=dff, bias_row=bias_row)
    vmem = pl.BlockSpec(memory_space=pltpu.MemorySpace.VMEM)

    # Single invocation (no grid): the whole working set is a few hundred KB,
    # far under VMEM limits on all generations.  If S*B grows, re-introduce a
    # leading "parallel" grid axis (v7x second TensorCore) and tile the
    # attention over KV blocks instead of the single-shot (N,N) score matrix.
    return pl.pallas_call(
        kern,
        out_shape=jax.ShapeDtypeStruct((S, B, D), src.dtype),
        in_specs=[vmem, vmem, vmem],
        out_specs=vmem,
    )(src, pos, packed_params)


def reference_jax(src, pos, params, nhead=NHEAD):
    """Pure-JAX reference matching PyTorch forward_post (dropout=identity)."""
    S, B, D = src.shape
    dh = D // nhead
    scale = 1.0 / math.sqrt(dh)
    qk_in = src + pos

    def proj(x, w, b):
        return jnp.einsum("sbd,ed->sbe", x, w) + b

    q = proj(qk_in, params["wq"], params["bq"][0])
    k = proj(qk_in, params["wk"], params["bk"][0])
    v = proj(src, params["wv"], params["bv"][0])

    q = q.reshape(S, B, nhead, dh).transpose(1, 2, 0, 3) * scale  # (B,H,S,dh)
    k = k.reshape(S, B, nhead, dh).transpose(1, 2, 0, 3)
    v = v.reshape(S, B, nhead, dh).transpose(1, 2, 0, 3)
    s = jnp.einsum("bhqd,bhkd->bhqk", q, k)
    p = jax.nn.softmax(s, axis=-1)
    attn = jnp.einsum("bhqk,bhkd->bhqd", p, v)               # (B,H,S,dh)
    attn = attn.transpose(2, 0, 1, 3).reshape(S, B, D)
    src2 = jnp.einsum("sbd,ed->sbe", attn, params["wo"]) + params["bo"][0]

    def layernorm(x, g, b):
        mu = x.mean(-1, keepdims=True)
        var = ((x - mu) ** 2).mean(-1, keepdims=True)
        return (x - mu) * jax.lax.rsqrt(var + LN_EPS) * g[0] + b[0]

    y = layernorm(src + src2, params["ln1_g"], params["ln1_b"])
    h1 = jax.nn.relu(jnp.einsum("sbd,fd->sbf", y, params["w1"]) + params["b1"][0])
    ff = jnp.einsum("sbf,df->sbd", h1, params["w2"]) + params["b2"][0]
    return layernorm(y + ff, params["ln2_g"], params["ln2_b"])


def init_params(key, d_model=D_MODEL, dff=DIM_FF):
    ks = jax.random.split(key, 12)
    s = 0.05
    f = jnp.float32
    return {
        "wq": (jax.random.normal(ks[0], (d_model, d_model), f) * s),
        "wk": (jax.random.normal(ks[1], (d_model, d_model), f) * s),
        "wv": (jax.random.normal(ks[2], (d_model, d_model), f) * s),
        "bq": (jax.random.normal(ks[3], (1, d_model), f) * s),
        "bk": (jax.random.normal(ks[4], (1, d_model), f) * s),
        "bv": (jax.random.normal(ks[5], (1, d_model), f) * s),
        "wo": (jax.random.normal(ks[6], (d_model, d_model), f) * s),
        "bo": (jax.random.normal(ks[7], (1, d_model), f) * s),
        "ln1_g": jnp.ones((1, d_model), f),
        "ln1_b": jnp.zeros((1, d_model), f),
        "w1": (jax.random.normal(ks[8], (dff, d_model), f) * s),
        "b1": (jax.random.normal(ks[9], (1, dff), f) * s),
        "w2": (jax.random.normal(ks[10], (d_model, dff), f) * s),
        "b2": (jax.random.normal(ks[11], (1, d_model), f) * s),
        "ln2_g": jnp.ones((1, d_model), f),
        "ln2_b": jnp.zeros((1, d_model), f),
    }


if __name__ == "__main__":
    key = jax.random.PRNGKey(0)
    k_src, k_pos, k_par = jax.random.split(key, 3)

    src = jax.random.normal(k_src, (SEQ, BATCH, D_MODEL), jnp.float32)
    pos = jax.random.normal(k_pos, (SEQ, BATCH, D_MODEL), jnp.float32)
    params = init_params(k_par)

    # One-time parameter preparation (kept off the per-call hot path).
    packed = jax.block_until_ready(prepare_params(params))

    layer = jax.jit(functools.partial(transformer_encoder_layer,
                                      nhead=NHEAD, dff=DIM_FF))
    out = jax.block_until_ready(layer(src, pos, packed))

    ref = reference_jax(src, pos, params)
    assert out.shape == (SEQ, BATCH, D_MODEL)
    max_err = float(jnp.max(jnp.abs(out - ref)))
    # 1e-3 tolerance: softmax denominator uses the EUP approximate reciprocal.
    assert jnp.allclose(out, ref, atol=1e-3, rtol=1e-3), max_err
    print("KERNEL_OK")
</pallas_src>

<mosaic_0001>
module attributes {stable_mosaic.version = 11 : i64} {
  func.func @_encoder_layer_kernel(%arg0: memref<8x2x32xf32, #tpu.memory_space<vmem>>, %arg1: memref<8x2x32xf32, #tpu.memory_space<vmem>>, %arg2: memref<168x128xf32, #tpu.memory_space<vmem>>, %arg3: memref<8x2x32xf32, #tpu.memory_space<vmem>>) attributes {dimension_semantics = [], scalar_prefetch = 0 : i64, scratch_operands = 0 : i64, tpu.core_type = #tpu.core_type<tc>} {
    %c0 = arith.constant 0 : index
    %c0_0 = arith.constant 0 : index
    %c0_1 = arith.constant 0 : index
    %0 = vector.load %arg0[%c0, %c0_0, %c0_1] : memref<8x2x32xf32, #tpu.memory_space<vmem>>, vector<8x2x32xf32>
    %c0_2 = arith.constant 0 : index
    %c0_3 = arith.constant 0 : index
    %c0_4 = arith.constant 0 : index
    %1 = vector.load %arg1[%c0_2, %c0_3, %c0_4] : memref<8x2x32xf32, #tpu.memory_space<vmem>>, vector<8x2x32xf32>
    %2 = vector.shape_cast %0 : vector<8x2x32xf32> to vector<16x32xf32>
    %3 = vector.shape_cast %1 : vector<8x2x32xf32> to vector<16x32xf32>
    %c0_5 = arith.constant 0 : index
    %c0_6 = arith.constant 0 : index
    %4 = vector.load %arg2[%c0_5, %c0_6] : memref<168x128xf32, #tpu.memory_space<vmem>>, vector<32x96xf32>
    %c32 = arith.constant 32 : index
    %c0_7 = arith.constant 0 : index
    %5 = vector.load %arg2[%c32, %c0_7] : memref<168x128xf32, #tpu.memory_space<vmem>>, vector<32x32xf32>
    %c64 = arith.constant 64 : index
    %c0_8 = arith.constant 0 : index
    %6 = vector.load %arg2[%c64, %c0_8] : memref<168x128xf32, #tpu.memory_space<vmem>>, vector<32x64xf32>
    %c96 = arith.constant 96 : index
    %c0_9 = arith.constant 0 : index
    %7 = vector.load %arg2[%c96, %c0_9] : memref<168x128xf32, #tpu.memory_space<vmem>>, vector<64x32xf32>
    %c160 = arith.constant 160 : index
    %c0_10 = arith.constant 0 : index
    %8 = vector.load %arg2[%c160, %c0_10] : memref<168x128xf32, #tpu.memory_space<vmem>>, vector<8x128xf32>
    %9 = vector.extract_strided_slice %8 {offsets = [0, 0], sizes = [1, 96], strides = [1, 1]} : vector<8x128xf32> to vector<1x96xf32>
    %10 = vector.extract_strided_slice %8 {offsets = [1, 0], sizes = [1, 32], strides = [1, 1]} : vector<8x128xf32> to vector<1x32xf32>
    %11 = vector.extract_strided_slice %8 {offsets = [2, 0], sizes = [1, 64], strides = [1, 1]} : vector<8x128xf32> to vector<1x64xf32>
    %12 = vector.extract_strided_slice %8 {offsets = [3, 0], sizes = [1, 32], strides = [1, 1]} : vector<8x128xf32> to vector<1x32xf32>
    %13 = vector.extract_strided_slice %8 {offsets = [4, 0], sizes = [1, 32], strides = [1, 1]} : vector<8x128xf32> to vector<1x32xf32>
    %14 = vector.extract_strided_slice %8 {offsets = [5, 0], sizes = [1, 32], strides = [1, 1]} : vector<8x128xf32> to vector<1x32xf32>
    %15 = vector.extract_strided_slice %8 {offsets = [6, 0], sizes = [1, 32], strides = [1, 1]} : vector<8x128xf32> to vector<1x32xf32>
    %16 = vector.extract_strided_slice %8 {offsets = [7, 0], sizes = [1, 32], strides = [1, 1]} : vector<8x128xf32> to vector<1x32xf32>
    %17 = tpu.concatenate %2, %3 in 0 : vector<16x32xf32>, vector<16x32xf32> -> vector<32x32xf32>
    %cst = arith.constant dense<0.000000e+00> : vector<32x96xf32>
    %18 = tpu.matmul %17, %4, %cst {dimension_numbers = #tpu.dot_dimension_numbers<[1], [0], [0], [1], [0, 0, 1, 1], [], []>} : vector<32x32xf32>, vector<32x96xf32>, vector<32x96xf32> -> vector<32x96xf32>
    %19 = vector.extract_strided_slice %18 {offsets = [0, 0], sizes = [16, 96], strides = [1, 1]} : vector<32x96xf32> to vector<16x96xf32>
    %20 = vector.broadcast %9 : vector<1x96xf32> to vector<16x96xf32>
    %21 = arith.addf %19, %20 : vector<16x96xf32>
    %22 = vector.extract_strided_slice %18 {offsets = [16, 0], sizes = [16, 96], strides = [1, 1]} : vector<32x96xf32> to vector<16x96xf32>
    %23 = vector.extract_strided_slice %21 {offsets = [0, 0], sizes = [16, 32], strides = [1, 1]} : vector<16x96xf32> to vector<16x32xf32>
    %24 = vector.extract_strided_slice %22 {offsets = [0, 0], sizes = [16, 32], strides = [1, 1]} : vector<16x96xf32> to vector<16x32xf32>
    %25 = arith.addf %23, %24 : vector<16x32xf32>
    %26 = vector.extract_strided_slice %21 {offsets = [0, 32], sizes = [16, 32], strides = [1, 1]} : vector<16x96xf32> to vector<16x32xf32>
    %27 = vector.extract_strided_slice %22 {offsets = [0, 32], sizes = [16, 32], strides = [1, 1]} : vector<16x96xf32> to vector<16x32xf32>
    %28 = arith.addf %26, %27 : vector<16x32xf32>
    %29 = vector.extract_strided_slice %21 {offsets = [0, 64], sizes = [16, 32], strides = [1, 1]} : vector<16x96xf32> to vector<16x32xf32>
    %30 = tpu.iota {dimensions = array<i32: 1>} : vector<4x32xi32>
    %31 = tpu.iota {dimensions = array<i32: 0>} : vector<4x32xi32>
    %c8_i32 = arith.constant 8 : i32
    %32 = vector.broadcast %c8_i32 : i32 to vector<4x32xi32>
    %33 = arith.muli %31, %32 : vector<4x32xi32>
    %34 = arith.cmpi sge, %30, %33 : vector<4x32xi32>
    %c1_i32 = arith.constant 1 : i32
    %35 = vector.broadcast %c1_i32 : i32 to vector<4x32xi32>
    %36 = arith.addi %31, %35 : vector<4x32xi32>
    %c8_i32_11 = arith.constant 8 : i32
    %37 = vector.broadcast %c8_i32_11 : i32 to vector<4x32xi32>
    %38 = arith.muli %36, %37 : vector<4x32xi32>
    %39 = arith.cmpi slt, %30, %38 : vector<4x32xi32>
    %40 = arith.andi %34, %39 : vector<4x32xi1>
    %41 = arith.extui %40 : vector<4x32xi1> to vector<4x32xi32>
    %42 = arith.sitofp %41 : vector<4x32xi32> to vector<4x32xf32>
    %43 = vector.shape_cast %25 : vector<16x32xf32> to vector<1x16x32xf32>
    %44 = vector.shape_cast %42 : vector<4x32xf32> to vector<4x1x32xf32>
    %45 = vector.broadcast %43 : vector<1x16x32xf32> to vector<4x16x32xf32>
    %46 = vector.broadcast %44 : vector<4x1x32xf32> to vector<4x16x32xf32>
    %47 = arith.mulf %45, %46 : vector<4x16x32xf32>
    %48 = vector.shape_cast %47 : vector<4x16x32xf32> to vector<64x32xf32>
    %cst_12 = arith.constant dense<0.000000e+00> : vector<64x16xf32>
    %49 = tpu.matmul %48, %28, %cst_12 {dimension_numbers = #tpu.dot_dimension_numbers<[1], [1], [0], [0], [0, 0, 1, 0], [], []>} : vector<64x32xf32>, vector<16x32xf32>, vector<64x16xf32> -> vector<64x16xf32>
    %50 = tpu.iota {dimensions = array<i32: 0>} : vector<64x16xi32>
    %51 = tpu.iota {dimensions = array<i32: 1>} : vector<64x16xi32>
    %c1_i32_13 = arith.constant 1 : i32
    %52 = vector.broadcast %c1_i32_13 : i32 to vector<64x16xi32>
    %53 = arith.andi %50, %52 : vector<64x16xi32>
    %c1_i32_14 = arith.constant 1 : i32
    %54 = vector.broadcast %c1_i32_14 : i32 to vector<64x16xi32>
    %55 = arith.andi %51, %54 : vector<64x16xi32>
    %56 = arith.cmpi eq, %53, %55 : vector<64x16xi32>
    %cst_15 = arith.constant -1.000000e+09 : f32
    %57 = vector.broadcast %cst_15 : f32 to vector<64x16xf32>
    %58 = arith.select %56, %49, %57 : vector<64x16xi1>, vector<64x16xf32>
    %cst_16 = arith.constant dense<0xFF800000> : vector<64xf32>
    %59 = vector.multi_reduction <maximumf>, %58, %cst_16 [1] : vector<64x16xf32> to vector<64xf32>
    %60 = vector.shape_cast %59 : vector<64xf32> to vector<64x1xf32>
    %61 = vector.broadcast %60 : vector<64x1xf32> to vector<64x16xf32>
    %62 = arith.subf %58, %61 : vector<64x16xf32>
    %63 = math.exp %62 : vector<64x16xf32>
    %cst_17 = arith.constant dense<0.000000e+00> : vector<64xf32>
    %64 = vector.multi_reduction <add>, %63, %cst_17 [1] : vector<64x16xf32> to vector<64xf32>
    %65 = vector.shape_cast %64 : vector<64xf32> to vector<64x1xf32>
    %66 = tpu.reciprocal %65 {approx = true} : vector<64x1xf32> -> vector<64x1xf32>
    %67 = vector.broadcast %66 : vector<64x1xf32> to vector<64x16xf32>
    %68 = arith.mulf %63, %67 : vector<64x16xf32>
    %cst_18 = arith.constant dense<0.000000e+00> : vector<64x32xf32>
    %69 = tpu.matmul %68, %29, %cst_18 {dimension_numbers = #tpu.dot_dimension_numbers<[1], [0], [0], [1], [0, 0, 1, 1], [], []>} : vector<64x16xf32>, vector<16x32xf32>, vector<64x32xf32> -> vector<64x32xf32>
    %70 = vector.shape_cast %69 : vector<64x32xf32> to vector<4x16x32xf32>
    %71 = vector.shape_cast %42 : vector<4x32xf32> to vector<4x1x32xf32>
    %72 = vector.broadcast %71 : vector<4x1x32xf32> to vector<4x16x32xf32>
    %73 = arith.mulf %70, %72 : vector<4x16x32xf32>
    %cst_19 = arith.constant dense<0.000000e+00> : vector<16x32xf32>
    %74 = vector.multi_reduction <add>, %73, %cst_19 [0] : vector<4x16x32xf32> to vector<16x32xf32>
    %cst_20 = arith.constant dense<0.000000e+00> : vector<16x32xf32>
    %75 = tpu.matmul %74, %5, %cst_20 {dimension_numbers = #tpu.dot_dimension_numbers<[1], [0], [0], [1], [0, 0, 1, 1], [], []>} : vector<16x32xf32>, vector<32x32xf32>, vector<16x32xf32> -> vector<16x32xf32>
    %76 = arith.addf %2, %75 : vector<16x32xf32>
    %77 = vector.broadcast %10 : vector<1x32xf32> to vector<16x32xf32>
    %78 = arith.addf %76, %77 : vector<16x32xf32>
    %cst_21 = arith.constant dense<0.000000e+00> : vector<16xf32>
    %79 = vector.multi_reduction <add>, %78, %cst_21 [1] : vector<16x32xf32> to vector<16xf32>
    %80 = vector.shape_cast %79 : vector<16xf32> to vector<16x1xf32>
    %cst_22 = arith.constant 3.200000e+01 : f32
    %81 = vector.broadcast %cst_22 : f32 to vector<16x1xf32>
    %82 = arith.divf %80, %81 : vector<16x1xf32>
    %83 = vector.broadcast %82 : vector<16x1xf32> to vector<16x32xf32>
    %84 = arith.subf %78, %83 : vector<16x32xf32>
    %85 = arith.mulf %84, %84 : vector<16x32xf32>
    %cst_23 = arith.constant dense<0.000000e+00> : vector<16xf32>
    %86 = vector.multi_reduction <add>, %85, %cst_23 [1] : vector<16x32xf32> to vector<16xf32>
    %87 = vector.shape_cast %86 : vector<16xf32> to vector<16x1xf32>
    %cst_24 = arith.constant 3.200000e+01 : f32
    %88 = vector.broadcast %cst_24 : f32 to vector<16x1xf32>
    %89 = arith.divf %87, %88 : vector<16x1xf32>
    %90 = vector.broadcast %82 : vector<16x1xf32> to vector<16x32xf32>
    %91 = arith.subf %78, %90 : vector<16x32xf32>
    %cst_25 = arith.constant 9.99999974E-6 : f32
    %92 = vector.broadcast %cst_25 : f32 to vector<16x1xf32>
    %93 = arith.addf %89, %92 : vector<16x1xf32>
    %94 = math.rsqrt %93 : vector<16x1xf32>
    %95 = vector.broadcast %94 : vector<16x1xf32> to vector<16x32xf32>
    %96 = arith.mulf %91, %95 : vector<16x32xf32>
    %97 = vector.broadcast %13 : vector<1x32xf32> to vector<16x32xf32>
    %98 = arith.mulf %96, %97 : vector<16x32xf32>
    %99 = vector.broadcast %14 : vector<1x32xf32> to vector<16x32xf32>
    %100 = arith.addf %98, %99 : vector<16x32xf32>
    %cst_26 = arith.constant dense<0.000000e+00> : vector<16x64xf32>
    %101 = tpu.matmul %100, %6, %cst_26 {dimension_numbers = #tpu.dot_dimension_numbers<[1], [0], [0], [1], [0, 0, 1, 1], [], []>} : vector<16x32xf32>, vector<32x64xf32>, vector<16x64xf32> -> vector<16x64xf32>
    %102 = vector.broadcast %11 : vector<1x64xf32> to vector<16x64xf32>
    %103 = arith.addf %101, %102 : vector<16x64xf32>
    %cst_27 = arith.constant 0.000000e+00 : f32
    %104 = vector.broadcast %cst_27 : f32 to vector<16x64xf32>
    %105 = arith.maximumf %103, %104 : vector<16x64xf32>
    %cst_28 = arith.constant dense<0.000000e+00> : vector<16x32xf32>
    %106 = tpu.matmul %105, %7, %cst_28 {dimension_numbers = #tpu.dot_dimension_numbers<[1], [0], [0], [1], [0, 0, 1, 1], [], []>} : vector<16x64xf32>, vector<64x32xf32>, vector<16x32xf32> -> vector<16x32xf32>
    %107 = arith.addf %100, %106 : vector<16x32xf32>
    %108 = vector.broadcast %12 : vector<1x32xf32> to vector<16x32xf32>
    %109 = arith.addf %107, %108 : vector<16x32xf32>
    %cst_29 = arith.constant dense<0.000000e+00> : vector<16xf32>
    %110 = vector.multi_reduction <add>, %109, %cst_29 [1] : vector<16x32xf32> to vector<16xf32>
    %111 = vector.shape_cast %110 : vector<16xf32> to vector<16x1xf32>
    %cst_30 = arith.constant 3.200000e+01 : f32
    %112 = vector.broadcast %cst_30 : f32 to vector<16x1xf32>
    %113 = arith.divf %111, %112 : vector<16x1xf32>
    %114 = vector.broadcast %113 : vector<16x1xf32> to vector<16x32xf32>
    %115 = arith.subf %109, %114 : vector<16x32xf32>
    %116 = arith.mulf %115, %115 : vector<16x32xf32>
    %cst_31 = arith.constant dense<0.000000e+00> : vector<16xf32>
    %117 = vector.multi_reduction <add>, %116, %cst_31 [1] : vector<16x32xf32> to vector<16xf32>
    %118 = vector.shape_cast %117 : vector<16xf32> to vector<16x1xf32>
    %cst_32 = arith.constant 3.200000e+01 : f32
    %119 = vector.broadcast %cst_32 : f32 to vector<16x1xf32>
    %120 = arith.divf %118, %119 : vector<16x1xf32>
    %121 = vector.broadcast %113 : vector<16x1xf32> to vector<16x32xf32>
    %122 = arith.subf %109, %121 : vector<16x32xf32>
    %cst_33 = arith.constant 9.99999974E-6 : f32
    %123 = vector.broadcast %cst_33 : f32 to vector<16x1xf32>
    %124 = arith.addf %120, %123 : vector<16x1xf32>
    %125 = math.rsqrt %124 : vector<16x1xf32>
    %126 = vector.broadcast %125 : vector<16x1xf32> to vector<16x32xf32>
    %127 = arith.mulf %122, %126 : vector<16x32xf32>
    %128 = vector.broadcast %15 : vector<1x32xf32> to vector<16x32xf32>
    %129 = arith.mulf %127, %128 : vector<16x32xf32>
    %130 = vector.broadcast %16 : vector<1x32xf32> to vector<16x32xf32>
    %131 = arith.addf %129, %130 : vector<16x32xf32>
    %132 = vector.shape_cast %131 : vector<16x32xf32> to vector<8x2x32xf32>
    %c0_34 = arith.constant 0 : index
    %c0_35 = arith.constant 0 : index
    %c0_36 = arith.constant 0 : index
    %133 = vector.load %arg3[%c0_34, %c0_35, %c0_36] : memref<8x2x32xf32, #tpu.memory_space<vmem>>, vector<8x2x32xf32>
    tpu.vector_store %arg3[%c0_34, %c0_35, %c0_36], %132 {strides = array<i32>} : memref<8x2x32xf32, #tpu.memory_space<vmem>>, vector<8x2x32xf32>,
    return
  }
}

</mosaic_0001>

<llo_original>
// kernel: transformer_encoder_layer.1
$region0: #{transformer_encoder_layer.1}
  #allocation0 [shape = 'u32[]', space=smem, size = 0x4, offset = 0x4, fixed_abs, tag = 'smem constant byte address 0x4 - core index']
  #allocation1 [shape = 'u32[144,128]{1,0:T(1,128)}', space=vmem, size = 0x12000, scoped, tag = 'internal scratch']
  %s0 = inlined_call_operand.hbm [shape: f32[8,2,32], index: 0, kind: input, shape index: {}]
  %s1 = inlined_call_operand.hbm [shape: f32[8,2,32], index: 1, kind: input, shape index: {}]
  %s2 = inlined_call_operand.hbm [shape: f32[168,128], index: 2, kind: input, shape index: {}]
  %s3 = inlined_call_operand.hbm [shape: f32[8,2,32], index: 3, kind: output, shape index: {}]
  %s4 = sld [smem:[#allocation0]]
  $region34: #{transformer_encoder_layer.1} parent=0
    _
  %s6 = ssub.s32 1, %s4
  %s7 = scalar_select 0, %s6, %s4
  $region1: #{transformer_encoder_layer.1} parent=0
    #allocation2 [shape = 'u8[8192]{0}', space=vmem, size = 0x2000, scoped, tag = 'input window, operand 0, single buffered']
    #allocation3 [shape = 's32[1]{0}', space=sflag, size = 0x4, scoped, tag = 'scoped memory for transformer_encoder_layer.1']
    #allocation4 [shape = 's32[1]{0}', space=sflag, size = 0x4, scoped, tag = 'scoped memory for transformer_encoder_layer.1']
    #allocation5 [shape = 'u8[8192]{0}', space=vmem, size = 0x2000, scoped, tag = 'input window, operand 1, single buffered']
    #allocation6 [shape = 's32[1]{0}', space=sflag, size = 0x4, scoped, tag = 'scoped memory for transformer_encoder_layer.1']
    #allocation7 [shape = 'u8[86016]{0}', space=vmem, size = 0x15000, scoped, tag = 'input window, operand 2, single buffered']
    #allocation8 [shape = 'u8[8192]{0}', space=vmem, size = 0x2000, scoped, tag = 'output window, operand 0, single buffered']
    %8 = vsyncpa [#allocation3], 0
    %9 = vsyncpa [#allocation6], 0
    %10 = vsyncpa [#allocation4], 0
    // Predicated region
    $region2: #{transformer_encoder_layer.1} parent=1 // pred_check
      _
    $region3: #{transformer_encoder_layer.1} parent=1 // pred_check_branch
      %12 = sbr.rel (0) target = $region5
    $region4: #{transformer_encoder_layer.1} parent=1 // pred_region
      %s14 = ssub.s32 256, 256
      %15 = vsyncadd [#allocation3], %s14
      %s16 = sshll.u32 [#allocation2], 4
      %s17 = int_to_ptr.vmem [resolvable:$true] %s16
      %22 = dma.hbm_to_vmem [thread:$0]  %s0, 256, %s17, [#allocation3], 32, 32, 2
    $region5: #{transformer_encoder_layer.1} parent=1 // pred_fallthru
      _
    // Predicated region
    $region6: #{transformer_encoder_layer.1} parent=1 // pred_check
      _
    $region7: #{transformer_encoder_layer.1} parent=1 // pred_check_branch
      %24 = sbr.rel (0) target = $region9
    $region8: #{transformer_encoder_layer.1} parent=1 // pred_region
      %s26 = ssub.s32 256, 256
      %27 = vsyncadd [#allocation6], %s26
      %s28 = sshll.u32 [#allocation5], 4
      %s29 = int_to_ptr.vmem [resolvable:$true] %s28
      %34 = dma.hbm_to_vmem [thread:$0]  %s1, 256, %s29, [#allocation6], 32, 32, 2
    $region9: #{transformer_encoder_layer.1} parent=1 // pred_fallthru
      _
    // Predicated region
    $region10: #{transformer_encoder_layer.1} parent=1 // pred_check
      _
    $region11: #{transformer_encoder_layer.1} parent=1 // pred_check_branch
      %36 = sbr.rel (0) target = $region13
    $region12: #{transformer_encoder_layer.1} parent=1 // pred_region
      %s38 = ssub.s32 2688, 2688
      %39 = vsyncadd [#allocation6], %s38
      %s40 = sshll.u32 [#allocation7], 4
      %s41 = int_to_ptr.vmem [resolvable:$true] %s40
      %46 = dma.hbm_to_vmem [thread:$0]  %s2, 2688, %s41, [#allocation6], 128, 128, 8
    $region13: #{transformer_encoder_layer.1} parent=1 // pred_fallthru
      _
    // Predicated region
    $region14: #{transformer_encoder_layer.1} parent=1 // pred_check
      _
    $region15: #{transformer_encoder_layer.1} parent=1 // pred_check_branch
      %48 = sbr.rel (0) target = $region17
    $region16: #{transformer_encoder_layer.1} parent=1 // pred_region
      %49 = dma.done [#allocation3], 256
    $region17: #{transformer_encoder_layer.1} parent=1 // pred_fallthru
      _
    // Predicated region
    $region18: #{transformer_encoder_layer.1} parent=1 // pred_check
      _
    $region19: #{transformer_encoder_layer.1} parent=1 // pred_check_branch
      %51 = sbr.rel (0) target = $region21
    $region20: #{transformer_encoder_layer.1} parent=1 // pred_region
      %52 = dma.done [#allocation6], 256
    $region21: #{transformer_encoder_layer.1} parent=1 // pred_fallthru
      _
    // Predicated region
    $region22: #{transformer_encoder_layer.1} parent=1 // pred_check
      _
    $region23: #{transformer_encoder_layer.1} parent=1 // pred_check_branch
      %54 = sbr.rel (0) target = $region25
    $region24: #{transformer_encoder_layer.1} parent=1 // pred_region
      %55 = dma.done [#allocation6], 2688
    $region25: #{transformer_encoder_layer.1} parent=1 // pred_fallthru
      _
    %v56 = vld [vmem:[#allocation2] sm:$0x3]
    %v57 = vld [vmem:[#allocation2 + $0x2] sm:$0x3]
    %v58 = vld [vmem:[#allocation2 + $0x4] sm:$0x3]
    %v59 = vld [vmem:[#allocation2 + $0x6] sm:$0x3]
    %v60 = vld [vmem:[#allocation2 + $0x8] sm:$0x3]
    %v61 = vld [vmem:[#allocation2 + $0xa] sm:$0x3]
    %v62 = vld [vmem:[#allocation2 + $0xc] sm:$0x3]
    %v63 = vld [vmem:[#allocation2 + $0xe] sm:$0x3]
    %v64 = vld [vmem:[#allocation5] sm:$0x3]
    %v65 = vld [vmem:[#allocation5 + $0x2] sm:$0x3]
    %v66 = vld [vmem:[#allocation5 + $0x4] sm:$0x3]
    %v67 = vld [vmem:[#allocation5 + $0x6] sm:$0x3]
    %v68 = vld [vmem:[#allocation5 + $0x8] sm:$0x3]
    %v69 = vld [vmem:[#allocation5 + $0xa] sm:$0x3]
    %v70 = vld [vmem:[#allocation5 + $0xc] sm:$0x3]
    %v71 = vld [vmem:[#allocation5 + $0xe] sm:$0x3]
    %v72 = vld [vmem:[#allocation7] sm:$0xff]
    %v73 = vld [vmem:[#allocation7 + $0x8] sm:$0xff]
    %v74 = vld [vmem:[#allocation7 + $0x10] sm:$0xff]
    %v75 = vld [vmem:[#allocation7 + $0x18] sm:$0xff]
    %v76 = vld [vmem:[#allocation7 + $0x20] sm:$0xff]
    %v77 = vld [vmem:[#allocation7 + $0x28] sm:$0xff]
    %v78 = vld [vmem:[#allocation7 + $0x30] sm:$0xff]
    %v79 = vld [vmem:[#allocation7 + $0x38] sm:$0xff]
    %v80 = vld [vmem:[#allocation7 + $0x40] sm:$0xff]
    %v81 = vld [vmem:[#allocation7 + $0x48] sm:$0xff]
    %v82 = vld [vmem:[#allocation7 + $0x50] sm:$0xff]
    %v83 = vld [vmem:[#allocation7 + $0x58] sm:$0xff]
    %v84 = vld [vmem:[#allocation7 + $0x60] sm:$0xff]
    %v85 = vld [vmem:[#allocation7 + $0x68] sm:$0xff]
    %v86 = vld [vmem:[#allocation7 + $0x70] sm:$0xff]
    %v87 = vld [vmem:[#allocation7 + $0x78] sm:$0xff]
    %v88 = vld [vmem:[#allocation7 + $0x80] sm:$0xff]
    %v89 = vld [vmem:[#allocation7 + $0x88] sm:$0xff]
    %v90 = vld [vmem:[#allocation7 + $0x90] sm:$0xff]
    %v91 = vld [vmem:[#allocation7 + $0x98] sm:$0xff]
    %v92 = vld [vmem:[#allocation7 + $0xa0] sm:$0xff]
    %v101 = vcombine.low %v56, %v57
    %v102 = vcombine.low %v58, %v59
    %v104 = vunpack.c.l.s4 1983009808
    %v105 = vunpack.c.0.s8 %v104
    %v106 = vlaneseq
    %v107 = vshrl.u32 %v106, 7
    %v108 = vsub.s32 %v105, %v107
    %v109 = vrot.slane %v101, %v108
    %v111 = vunpack.c.l.s4 1983009808
    %v112 = vunpack.c.0.s8 %v111
    %v113 = vlaneseq
    %v114 = vshrl.u32 %v113, 7
    %v115 = vsub.s32 %v112, %v114
    %v116 = vrot.slane %v102, %v115
    %v117 = vcombine.low %v109, %v116
    %v118 = vcombine.low %v60, %v61
    %v119 = vcombine.low %v62, %v63
    %v121 = vunpack.c.l.s4 1983009808
    %v122 = vunpack.c.0.s8 %v121
    %v123 = vlaneseq
    %v124 = vshrl.u32 %v123, 7
    %v125 = vsub.s32 %v122, %v124
    %v126 = vrot.slane %v118, %v125
    %v128 = vunpack.c.l.s4 1983009808
    %v129 = vunpack.c.0.s8 %v128
    %v130 = vlaneseq
    %v131 = vshrl.u32 %v130, 7
    %v132 = vsub.s32 %v129, %v131
    %v133 = vrot.slane %v119, %v132
    %v134 = vcombine.low %v126, %v133
    %v143 = vcombine.low %v64, %v65
    %v144 = vcombine.low %v66, %v67
    %v146 = vunpack.c.l.s4 1983009808
    %v147 = vunpack.c.0.s8 %v146
    %v148 = vlaneseq
    %v149 = vshrl.u32 %v148, 7
    %v150 = vsub.s32 %v147, %v149
    %v151 = vrot.slane %v143, %v150
    %v153 = vunpack.c.l.s4 1983009808
    %v154 = vunpack.c.0.s8 %v153
    %v155 = vlaneseq
    %v156 = vshrl.u32 %v155, 7
    %v157 = vsub.s32 %v154, %v156
    %v158 = vrot.slane %v144, %v157
    %v159 = vcombine.low %v151, %v158
    %v160 = vcombine.low %v68, %v69
    %v161 = vcombine.low %v70, %v71
    %v163 = vunpack.c.l.s4 1983009808
    %v164 = vunpack.c.0.s8 %v163
    %v165 = vlaneseq
    %v166 = vshrl.u32 %v165, 7
    %v167 = vsub.s32 %v164, %v166
    %v168 = vrot.slane %v160, %v167
    %v170 = vunpack.c.l.s4 1983009808
    %v171 = vunpack.c.0.s8 %v170
    %v172 = vlaneseq
    %v173 = vshrl.u32 %v172, 7
    %v174 = vsub.s32 %v171, %v173
    %v175 = vrot.slane %v161, %v174
    %v176 = vcombine.low %v168, %v175
    %vm177 = vcmask 261120
    %v178 = vsel %vm177, %v117, 0
    %v180 = vsel %vm177, %v134, 0
    %v182 = vsel %vm177, %v159, 0
    %v184 = vsel %vm177, %v176, 0
    %186 = vmatprep.subr.mxu0 0.0
    %187 = vmatpush1.msra.mxu0 0.0
    %188 = vmatprep.subr.mxu0 0.0
    %189 = vmatpush1.msra.mxu0 0.0
    %190 = vmatprep.subr.mxu0 0.0
    %191 = vmatpush1.msra.mxu0 0.0
    %192 = vmatprep.subr.mxu0 0.0
    %193 = vmatpush1.msra.mxu0 0.0
    %194 = vmatprep.subr.mxu0 0.0
    %195 = vmatpush1.msra.mxu0 0.0
    %196 = vmatprep.subr.mxu0 0.0
    %197 = vmatpush1.msra.mxu0 0.0
    %198 = vmatprep.subr.mxu0 0.0
    %199 = vmatpush1.msra.mxu0 0.0
    %200 = vmatprep.subr.mxu0 0.0
    %201 = vmatpush1.msra.mxu0 0.0
    %202 = vmatprep.subr.mxu0 0.0
    %203 = vmatpush1.msra.mxu0 0.0
    %204 = vmatprep.subr.mxu0 0.0
    %205 = vmatpush1.msra.mxu0 0.0
    %206 = vmatprep.subr.mxu0 0.0
    %207 = vmatpush1.msra.mxu0 0.0
    %208 = vmatprep.subr.mxu0 0.0
    %209 = vmatpush1.msra.mxu0 0.0
    %210 = vmatprep.subr.mxu0 0.0
    %211 = vmatpush1.msra.mxu0 %v75
    %212 = vmatprep.subr.mxu0 0.0
    %213 = vmatpush1.msra.mxu0 %v74
    %214 = vmatprep.subr.mxu0 0.0
    %215 = vmatpush1.msra.mxu0 %v73
    %216 = vmatprep.subr.mxu0 0.0
    %217 = vmatpush1.msra.mxu0 %v72
    %218 = vmatprep.subr.mxu0 0.0
    %219 = vmatpush2.msra.mxu0 0.0
    %220 = vmatprep.subr.mxu0 0.0
    %221 = vmatpush2.msra.mxu0 0.0
    %222 = vmatprep.subr.mxu0 0.0
    %223 = vmatpush2.msra.mxu0 0.0
    %224 = vmatprep.subr.mxu0 0.0
    %225 = vmatpush2.msra.mxu0 0.0
    %226 = vmatprep.subr.mxu0 0.0
    %227 = vmatpush2.msra.mxu0 0.0
    %228 = vmatprep.subr.mxu0 0.0
    %229 = vmatpush2.msra.mxu0 0.0
    %230 = vmatprep.subr.mxu0 0.0
    %231 = vmatpush2.msra.mxu0 0.0
    %232 = vmatprep.subr.mxu0 0.0
    %233 = vmatpush2.msra.mxu0 0.0
    %234 = vmatprep.subr.mxu0 0.0
    %235 = vmatpush2.msra.mxu0 0.0
    %236 = vmatprep.subr.mxu0 0.0
    %237 = vmatpush2.msra.mxu0 0.0
    %238 = vmatprep.subr.mxu0 0.0
    %239 = vmatpush2.msra.mxu0 0.0
    %240 = vmatprep.subr.mxu0 0.0
    %241 = vmatpush2.msra.mxu0 0.0
    %242 = vmatprep.subr.mxu0 0.0
    %243 = vmatpush2.msra.mxu0 0.0
    %244 = vmatprep.subr.mxu0 0.0
    %245 = vmatpush2.msra.mxu0 0.0
    %246 = vmatprep.subr.mxu0 0.0
    %247 = vmatpush2.msra.mxu0 0.0
    %248 = vmatprep.subr.mxu0 0.0
    %249 = vmatpush2.msra.mxu0 0.0
    %250 = vmatprep.mubr.f32.mxu0 0.0
    %251 = vmatmul.mubr.f32.gmra.mxu0 %v178
    %v252 = vpop.f32.mrf.mxu0
    %v253 = vadd.f32 0.0, %v252
    %v254 = vpop.f32.mrf.mxu0
    %255 = vmatprep.mubr.f32.mxu0 0.0
    %256 = vmatmul.mubr.f32.gmra.mxu0 %v180
    %v257 = vpop.f32.mrf.mxu0
    %v258 = vadd.f32 0.0, %v257
    %v259 = vpop.f32.mrf.mxu0
    %260 = vmatprep.mubr.f32.mxu0 0.0
    %261 = vmatmul.mubr.f32.gmra.mxu0 %v182
    %v262 = vpop.f32.mrf.mxu0
    %v263 = vadd.f32 0.0, %v262
    %v264 = vpop.f32.mrf.mxu0
    %265 = vmatprep.mubr.f32.mxu0 0.0
    %266 = vmatmul.mubr.f32.gmra.mxu0 %v184
    %v267 = vpop.f32.mrf.mxu0
    %v268 = vadd.f32 0.0, %v267
    %v269 = vpop.f32.mrf.mxu0
    %270 = vdwg.mxu0
    %v271 = vlaneseq
    %v272 = vshrl.u32 %v271, 7
    %v273 = vsub.s32 0, %v272
    %v274 = vrot.slane %v92, %v273
    %v275 = vadd.f32 %v253, %v274
    %v276 = vadd.f32 %v258, %v274
    %v277 = vadd.f32 %v275, %v263
    %v278 = vadd.f32 %v276, %v268
    %v279 = vlaneseq
    %v280 = vand.u32 %v279, 127
    %v281 = vlaneseq
    %v282 = vshrl.u32 %v281, 7
    %v283 = vmul.u32 %v282, 8
    %vm284 = vcmp.ge.s32.totalorder %v280, %v283
    %v285 = vadd.s32 %v282, 1
    %v286 = vmul.u32 %v285, 8
    %vm287 = vcmp.lt.s32.totalorder %v280, %v286
    %vm288 = vmand %vm284, %vm287
    %v289 = vsel %vm288, 1, 0
    %v290 = vcvt.s32.f32 %v289
    %v293 = vunpack.c.l.s4 1966171168
    %v294 = vunpack.c.0.s8 %v293
    %v295 = vlaneseq
    %v296 = vshrl.u32 %v295, 7
    %v297 = vsub.s32 %v294, %v296
    %v298 = vrot.slane %v290, %v297
    %v299 = vcombine.high %v298, %v298
    %v301 = vunpack.c.l.s4 1966171168
    %v302 = vunpack.c.0.s8 %v301
    %v303 = vlaneseq
    %v304 = vshrl.u32 %v303, 7
    %v305 = vsub.s32 %v302, %v304
    %v306 = vrot.slane %v298, %v305
    %v308 = vunpack.c.l.s4 1966171168
    %v309 = vunpack.c.0.s8 %v308
    %v310 = vlaneseq
    %v311 = vshrl.u32 %v310, 7
    %v312 = vsub.s32 %v309, %v311
    %v313 = vrot.slane %v299, %v312
    %v314 = vcombine.high %v306, %v306
    %v315 = vcombine.high %v313, %v313
    %v316 = vlaneseq
    %v317 = vshrl.u32 %v316, 7
    %v318 = vsub.s32 0, %v317
    %v319 = vrot.slane %v306, %v318
    %v320 = vlaneseq
    %v321 = vshrl.u32 %v320, 7
    %v322 = vsub.s32 0, %v321
    %v323 = vrot.slane %v313, %v322
    %v324 = vlaneseq
    %v325 = vshrl.u32 %v324, 7
    %v326 = vsub.s32 0, %v325
    %v327 = vrot.slane %v314, %v326
    %v328 = vlaneseq
    %v329 = vshrl.u32 %v328, 7
    %v330 = vsub.s32 0, %v329
    %v331 = vrot.slane %v315, %v330
    %v336 = vmul.f32 %v277, %v319
    %v337 = vmul.f32 %v278, %v319
    %v338 = vmul.f32 %v277, %v323
    %v339 = vmul.f32 %v278, %v323
    %v340 = vmul.f32 %v277, %v327
    %v341 = vmul.f32 %v278, %v327
    %v342 = vmul.f32 %v277, %v331
    %v343 = vmul.f32 %v278, %v331
    %346 = vrot.lane.b32.xlu0 %v277, 96
    %v347 = vpop.permute.xlu0 %346
    %348 = vrot.lane.b32.xlu0 %v278, 96
    %v349 = vpop.permute.xlu0 %348
    %v351 = vsel %vm177, %v336, 0
    %v354 = vsel %vm177, %v337, 0
    %v357 = vsel %vm177, %v338, 0
    %v360 = vsel %vm177, %v339, 0
    %v363 = vsel %vm177, %v340, 0
    %v366 = vsel %vm177, %v341, 0
    %v369 = vsel %vm177, %v342, 0
    %v372 = vsel %vm177, %v343, 0
    %v374 = vsel %vm177, %v347, 0
    %v376 = vsel %vm177, %v349, 0
    %378 = vmatprep.subr.mxu0 0.0
    %379 = vmatpush1.xpose.msra.mxu0 0.0
    %380 = vmatprep.subr.mxu0 0.0
    %381 = vmatpush1.xpose.msra.mxu0 0.0
    %382 = vmatprep.subr.mxu0 0.0
    %383 = vmatpush1.xpose.msra.mxu0 0.0
    %384 = vmatprep.subr.mxu0 0.0
    %385 = vmatpush1.xpose.msra.mxu0 0.0
    %386 = vmatprep.subr.mxu0 0.0
    %387 = vmatpush1.xpose.msra.mxu0 0.0
    %388 = vmatprep.subr.mxu0 0.0
    %389 = vmatpush1.xpose.msra.mxu0 0.0
    %390 = vmatprep.subr.mxu0 0.0
    %391 = vmatpush1.xpose.msra.mxu0 0.0
    %392 = vmatprep.subr.mxu0 0.0
    %393 = vmatpush1.xpose.msra.mxu0 0.0
    %394 = vmatprep.subr.mxu0 0.0
    %395 = vmatpush1.xpose.msra.mxu0 0.0
    %396 = vmatprep.subr.mxu0 0.0
    %397 = vmatpush1.xpose.msra.mxu0 0.0
    %398 = vmatprep.subr.mxu0 0.0
    %399 = vmatpush1.xpose.msra.mxu0 0.0
    %400 = vmatprep.subr.mxu0 0.0
    %401 = vmatpush1.xpose.msra.mxu0 0.0
    %402 = vmatprep.subr.mxu0 0.0
    %403 = vmatpush1.xpose.msra.mxu0 0.0
    %404 = vmatprep.subr.mxu0 0.0
    %405 = vmatpush1.xpose.msra.mxu0 0.0
    %406 = vmatprep.subr.mxu0 0.0
    %407 = vmatpush1.xpose.msra.mxu0 %v376
    %408 = vmatprep.subr.mxu0 0.0
    %409 = vmatpush1.xpose.msra.mxu0 %v374
    %410 = vmatprep.subr.mxu0 0.0
    %411 = vmatpush2.xpose.msra.mxu0 0.0
    %412 = vmatprep.subr.mxu0 0.0
    %413 = vmatpush2.xpose.msra.mxu0 0.0
    %414 = vmatprep.subr.mxu0 0.0
    %415 = vmatpush2.xpose.msra.mxu0 0.0
    %416 = vmatprep.subr.mxu0 0.0
    %417 = vmatpush2.xpose.msra.mxu0 0.0
    %418 = vmatprep.subr.mxu0 0.0
    %419 = vmatpush2.xpose.msra.mxu0 0.0
    %420 = vmatprep.subr.mxu0 0.0
    %421 = vmatpush2.xpose.msra.mxu0 0.0
    %422 = vmatprep.subr.mxu0 0.0
    %423 = vmatpush2.xpose.msra.mxu0 0.0
    %424 = vmatprep.subr.mxu0 0.0
    %425 = vmatpush2.xpose.msra.mxu0 0.0
    %426 = vmatprep.subr.mxu0 0.0
    %427 = vmatpush2.xpose.msra.mxu0 0.0
    %428 = vmatprep.subr.mxu0 0.0
    %429 = vmatpush2.xpose.msra.mxu0 0.0
    %430 = vmatprep.subr.mxu0 0.0
    %431 = vmatpush2.xpose.msra.mxu0 0.0
    %432 = vmatprep.subr.mxu0 0.0
    %433 = vmatpush2.xpose.msra.mxu0 0.0
    %434 = vmatprep.subr.mxu0 0.0
    %435 = vmatpush2.xpose.msra.mxu0 0.0
    %436 = vmatprep.subr.mxu0 0.0
    %437 = vmatpush2.xpose.msra.mxu0 0.0
    %438 = vmatprep.subr.mxu0 0.0
    %439 = vmatpush2.xpose.msra.mxu0 0.0
    %440 = vmatprep.subr.mxu0 0.0
    %441 = vmatpush2.xpose.msra.mxu0 0.0
    %442 = vmatprep.mubr.f32.mxu0 0.0
    %443 = vmatmul.mubr.f32.gmra.mxu0 %v351
    %v444 = vpop.f32.mrf.mxu0
    %v445 = vadd.f32 0.0, %v444
    %v446 = vpop.f32.mrf.mxu0
    %447 = vmatprep.mubr.f32.mxu0 0.0
    %448 = vmatmul.mubr.f32.gmra.mxu0 %v354
    %v449 = vpop.f32.mrf.mxu0
    %v450 = vadd.f32 0.0, %v449
    %v451 = vpop.f32.mrf.mxu0
    %452 = vmatprep.mubr.f32.mxu0 0.0
    %453 = vmatmul.mubr.f32.gmra.mxu0 %v357
    %v454 = vpop.f32.mrf.mxu0
    %v455 = vadd.f32 0.0, %v454
    %v456 = vpop.f32.mrf.mxu0
    %457 = vmatprep.mubr.f32.mxu0 0.0
    %458 = vmatmul.mubr.f32.gmra.mxu0 %v360
    %v459 = vpop.f32.mrf.mxu0
    %v460 = vadd.f32 0.0, %v459
    %v461 = vpop.f32.mrf.mxu0
    %462 = vmatprep.mubr.f32.mxu0 0.0
    %463 = vmatmul.mubr.f32.gmra.mxu0 %v363
    %v464 = vpop.f32.mrf.mxu0
    %v465 = vadd.f32 0.0, %v464
    %v466 = vpop.f32.mrf.mxu0
    %467 = vmatprep.mubr.f32.mxu0 0.0
    %468 = vmatmul.mubr.f32.gmra.mxu0 %v366
    %v469 = vpop.f32.mrf.mxu0
    %v470 = vadd.f32 0.0, %v469
    %v471 = vpop.f32.mrf.mxu0
    %472 = vmatprep.mubr.f32.mxu0 0.0
    %473 = vmatmul.mubr.f32.gmra.mxu0 %v369
    %v474 = vpop.f32.mrf.mxu0
    %v475 = vadd.f32 0.0, %v474
    %v476 = vpop.f32.mrf.mxu0
    %477 = vmatprep.mubr.f32.mxu0 0.0
    %478 = vmatmul.mubr.f32.gmra.mxu0 %v372
    %v479 = vpop.f32.mrf.mxu0
    %v480 = vadd.f32 0.0, %v479
    %v481 = vpop.f32.mrf.mxu0
    %482 = vdwg.mxu0
    %v483 = vadd.s32 %v282, 8
    %v484 = vadd.s32 %v282, 16
    %v485 = vadd.s32 %v282, 24
    %v486 = vadd.s32 %v282, 32
    %v487 = vadd.s32 %v282, 40
    %v488 = vadd.s32 %v282, 48
    %v489 = vadd.s32 %v282, 56
    %v490 = vand.u32 %v282, 1
    %v491 = vand.u32 %v483, 1
    %v492 = vand.u32 %v484, 1
    %v493 = vand.u32 %v485, 1
    %v494 = vand.u32 %v486, 1
    %v495 = vand.u32 %v487, 1
    %v496 = vand.u32 %v488, 1
    %v497 = vand.u32 %v489, 1
    %v498 = vand.u32 %v280, 1
    %vm499 = vcmp.eq.s32.totalorder %v490, %v498
    %vm500 = vcmp.eq.s32.totalorder %v491, %v498
    %vm501 = vcmp.eq.s32.totalorder %v492, %v498
    %vm502 = vcmp.eq.s32.totalorder %v493, %v498
    %vm503 = vcmp.eq.s32.totalorder %v494, %v498
    %vm504 = vcmp.eq.s32.totalorder %v495, %v498
    %vm505 = vcmp.eq.s32.totalorder %v496, %v498
    %vm506 = vcmp.eq.s32.totalorder %v497, %v498
    %v507 = vsel %vm499, %v445, -1e+09
    %v508 = vsel %vm500, %v450, -1e+09
    %v509 = vsel %vm501, %v455, -1e+09
    %v510 = vsel %vm502, %v460, -1e+09
    %v511 = vsel %vm503, %v465, -1e+09
    %v512 = vsel %vm504, %v470, -1e+09
    %v513 = vsel %vm505, %v475, -1e+09
    %v514 = vsel %vm506, %v480, -1e+09
    %vm515 = vcmask 130048
    %v516 = vsel %vm515, %v507, -inf
    %517 = vmax.xlane.f32.xlu0 %v516
    %v518 = vpop.xlane.xlu0 %517
    %v519 = vsel %vm515, %v508, -inf
    %520 = vmax.xlane.f32.xlu0 %v519
    %v521 = vpop.xlane.xlu0 %520
    %v522 = vsel %vm515, %v509, -inf
    %523 = vmax.xlane.f32.xlu0 %v522
    %v524 = vpop.xlane.xlu0 %523
    %v525 = vsel %vm515, %v510, -inf
    %526 = vmax.xlane.f32.xlu0 %v525
    %v527 = vpop.xlane.xlu0 %526
    %v528 = vsel %vm515, %v511, -inf
    %529 = vmax.xlane.f32.xlu0 %v528
    %v530 = vpop.xlane.xlu0 %529
    %v531 = vsel %vm515, %v512, -inf
    %532 = vmax.xlane.f32.xlu0 %v531
    %v533 = vpop.xlane.xlu0 %532
    %v534 = vsel %vm515, %v513, -inf
    %535 = vmax.xlane.f32.xlu0 %v534
    %v536 = vpop.xlane.xlu0 %535
    %v537 = vsel %vm515, %v514, -inf
    %538 = vmax.xlane.f32.xlu0 %v537
    %v539 = vpop.xlane.xlu0 %538
    %v540 = vsub.f32 %v507, %v518
    %v541 = vsub.f32 %v508, %v521
    %v542 = vsub.f32 %v509, %v524
    %v543 = vsub.f32 %v510, %v527
    %v544 = vsub.f32 %v511, %v530
    %v545 = vsub.f32 %v512, %v533
    %v546 = vsub.f32 %v513, %v536
    %v547 = vsub.f32 %v514, %v539
    %v548 = vmul.f32 %v540, 1.442695
    %v549 = vpow.pop %v548
    %v550 = vmul.f32 %v541, 1.442695
    %v551 = vpow.pop %v550
    %v552 = vmul.f32 %v542, 1.442695
    %v553 = vpow.pop %v552
    %v554 = vmul.f32 %v543, 1.442695
    %v555 = vpow.pop %v554
    %v556 = vmul.f32 %v544, 1.442695
    %v557 = vpow.pop %v556
    %v558 = vmul.f32 %v545, 1.442695
    %v559 = vpow.pop %v558
    %v560 = vmul.f32 %v546, 1.442695
    %v561 = vpow.pop %v560
    %v562 = vmul.f32 %v547, 1.442695
    %v563 = vpow.pop %v562
    %v564 = vsel %vm515, %v549, 0.0
    %565 = vadd.xlane.f32.xlu0 %v564
    %v566 = vpop.xlane.xlu0 %565
    %v567 = vsel %vm515, %v551, 0.0
    %568 = vadd.xlane.f32.xlu0 %v567
    %v569 = vpop.xlane.xlu0 %568
    %v570 = vsel %vm515, %v553, 0.0
    %571 = vadd.xlane.f32.xlu0 %v570
    %v572 = vpop.xlane.xlu0 %571
    %v573 = vsel %vm515, %v555, 0.0
    %574 = vadd.xlane.f32.xlu0 %v573
    %v575 = vpop.xlane.xlu0 %574
    %v576 = vsel %vm515, %v557, 0.0
    %577 = vadd.xlane.f32.xlu0 %v576
    %v578 = vpop.xlane.xlu0 %577
    %v579 = vsel %vm515, %v559, 0.0
    %580 = vadd.xlane.f32.xlu0 %v579
    %v581 = vpop.xlane.xlu0 %580
    %v582 = vsel %vm515, %v561, 0.0
    %583 = vadd.xlane.f32.xlu0 %v582
    %v584 = vpop.xlane.xlu0 %583
    %v585 = vsel %vm515, %v563, 0.0
    %586 = vadd.xlane.f32.xlu0 %v585
    %v587 = vpop.xlane.xlu0 %586
    %v588 = vrcp.pop %v566
    %v589 = vrcp.pop %v569
    %v590 = vrcp.pop %v572
    %v591 = vrcp.pop %v575
    %v592 = vrcp.pop %v578
    %v593 = vrcp.pop %v581
    %v594 = vrcp.pop %v584
    %v595 = vrcp.pop %v587
    %v596 = vmul.f32 %v549, %v588
    %v597 = vmul.f32 %v551, %v589
    %v598 = vmul.f32 %v553, %v590
    %v599 = vmul.f32 %v555, %v591
    %v600 = vmul.f32 %v557, %v592
    %v601 = vmul.f32 %v559, %v593
    %v602 = vmul.f32 %v561, %v594
    %v603 = vmul.f32 %v563, %v595
    %606 = vrot.lane.b32.xlu0 %v275, 64
    %v607 = vpop.permute.xlu0 %606
    %608 = vrot.lane.b32.xlu0 %v276, 64
    %v609 = vpop.permute.xlu0 %608
    %v613 = vsel %vm515, %v596, 0
    %v616 = vsel %vm515, %v597, 0
    %v619 = vsel %vm515, %v598, 0
    %v622 = vsel %vm515, %v599, 0
    %v625 = vsel %vm515, %v600, 0
    %v628 = vsel %vm515, %v601, 0
    %v631 = vsel %vm515, %v602, 0
    %v634 = vsel %vm515, %v603, 0
    %636 = vmatprep.subr.mxu0 0.0
    %637 = vmatpush1.msra.mxu0 0.0
    %638 = vmatprep.subr.mxu0 0.0
    %639 = vmatpush1.msra.mxu0 0.0
    %640 = vmatprep.subr.mxu0 0.0
    %641 = vmatpush1.msra.mxu0 0.0
    %642 = vmatprep.subr.mxu0 0.0
    %643 = vmatpush1.msra.mxu0 0.0
    %644 = vmatprep.subr.mxu0 0.0
    %645 = vmatpush1.msra.mxu0 0.0
    %646 = vmatprep.subr.mxu0 0.0
    %647 = vmatpush1.msra.mxu0 0.0
    %648 = vmatprep.subr.mxu0 0.0
    %649 = vmatpush1.msra.mxu0 0.0
    %650 = vmatprep.subr.mxu0 0.0
    %651 = vmatpush1.msra.mxu0 0.0
    %652 = vmatprep.subr.mxu0 0.0
    %653 = vmatpush1.msra.mxu0 0.0
    %654 = vmatprep.subr.mxu0 0.0
    %655 = vmatpush1.msra.mxu0 0.0
    %656 = vmatprep.subr.mxu0 0.0
    %657 = vmatpush1.msra.mxu0 0.0
    %658 = vmatprep.subr.mxu0 0.0
    %659 = vmatpush1.msra.mxu0 0.0
    %660 = vmatprep.subr.mxu0 0.0
    %661 = vmatpush1.msra.mxu0 0.0
    %662 = vmatprep.subr.mxu0 0.0
    %663 = vmatpush1.msra.mxu0 0.0
    %664 = vmatprep.subr.mxu0 0.0
    %665 = vmatpush1.msra.mxu0 %v609
    %666 = vmatprep.subr.mxu0 0.0
    %667 = vmatpush1.msra.mxu0 %v607
    %668 = vmatprep.subr.mxu0 0.0
    %669 = vmatpush2.msra.mxu0 0.0
    %670 = vmatprep.subr.mxu0 0.0
    %671 = vmatpush2.msra.mxu0 0.0
    %672 = vmatprep.subr.mxu0 0.0
    %673 = vmatpush2.msra.mxu0 0.0
    %674 = vmatprep.subr.mxu0 0.0
    %675 = vmatpush2.msra.mxu0 0.0
    %676 = vmatprep.subr.mxu0 0.0
    %677 = vmatpush2.msra.mxu0 0.0
    %678 = vmatprep.subr.mxu0 0.0
    %679 = vmatpush2.msra.mxu0 0.0
    %680 = vmatprep.subr.mxu0 0.0
    %681 = vmatpush2.msra.mxu0 0.0
    %682 = vmatprep.subr.mxu0 0.0
    %683 = vmatpush2.msra.mxu0 0.0
    %684 = vmatprep.subr.mxu0 0.0
    %685 = vmatpush2.msra.mxu0 0.0
    %686 = vmatprep.subr.mxu0 0.0
    %687 = vmatpush2.msra.mxu0 0.0
    %688 = vmatprep.subr.mxu0 0.0
    %689 = vmatpush2.msra.mxu0 0.0
    %690 = vmatprep.subr.mxu0 0.0
    %691 = vmatpush2.msra.mxu0 0.0
    %692 = vmatprep.subr.mxu0 0.0
    %693 = vmatpush2.msra.mxu0 0.0
    %694 = vmatprep.subr.mxu0 0.0
    %695 = vmatpush2.msra.mxu0 0.0
    %696 = vmatprep.subr.mxu0 0.0
    %697 = vmatpush2.msra.mxu0 0.0
    %698 = vmatprep.subr.mxu0 0.0
    %699 = vmatpush2.msra.mxu0 0.0
    %700 = vmatprep.mubr.f32.mxu0 0.0
    %701 = vmatmul.mubr.f32.gmra.mxu0 %v613
    %v702 = vpop.f32.mrf.mxu0
    %v703 = vadd.f32 0.0, %v702
    %v704 = vpop.f32.mrf.mxu0
    %705 = vmatprep.mubr.f32.mxu0 0.0
    %706 = vmatmul.mubr.f32.gmra.mxu0 %v616
    %v707 = vpop.f32.mrf.mxu0
    %v708 = vadd.f32 0.0, %v707
    %v709 = vpop.f32.mrf.mxu0
    %710 = vmatprep.mubr.f32.mxu0 0.0
    %711 = vmatmul.mubr.f32.gmra.mxu0 %v619
    %v712 = vpop.f32.mrf.mxu0
    %v713 = vadd.f32 0.0, %v712
    %v714 = vpop.f32.mrf.mxu0
    %715 = vmatprep.mubr.f32.mxu0 0.0
    %716 = vmatmul.mubr.f32.gmra.mxu0 %v622
    %v717 = vpop.f32.mrf.mxu0
    %v718 = vadd.f32 0.0, %v717
    %v719 = vpop.f32.mrf.mxu0
    %720 = vmatprep.mubr.f32.mxu0 0.0
    %721 = vmatmul.mubr.f32.gmra.mxu0 %v625
    %v722 = vpop.f32.mrf.mxu0
    %v723 = vadd.f32 0.0, %v722
    %v724 = vpop.f32.mrf.mxu0
    %725 = vmatprep.mubr.f32.mxu0 0.0
    %726 = vmatmul.mubr.f32.gmra.mxu0 %v628
    %v727 = vpop.f32.mrf.mxu0
    %v728 = vadd.f32 0.0, %v727
    %v729 = vpop.f32.mrf.mxu0
    %730 = vmatprep.mubr.f32.mxu0 0.0
    %731 = vmatmul.mubr.f32.gmra.mxu0 %v631
    %v732 = vpop.f32.mrf.mxu0
    %v733 = vadd.f32 0.0, %v732
    %v734 = vpop.f32.mrf.mxu0
    %735 = vmatprep.mubr.f32.mxu0 0.0
    %736 = vmatmul.mubr.f32.gmra.mxu0 %v634
    %v737 = vpop.f32.mrf.mxu0
    %v738 = vadd.f32 0.0, %v737
    %v739 = vpop.f32.mrf.mxu0
    %740 = vdwg.mxu0
    %v741 = vmul.f32 %v703, %v319
    %v742 = vmul.f32 %v708, %v319
    %v743 = vmul.f32 %v713, %v323
    %v744 = vmul.f32 %v718, %v323
    %v745 = vmul.f32 %v723, %v327
    %v746 = vmul.f32 %v728, %v327
    %v747 = vmul.f32 %v733, %v331
    %v748 = vmul.f32 %v738, %v331
    %v749 = vsel %vm177, %v741, 0.0
    %v750 = vsel %vm177, %v743, 0.0
    %v751 = vadd.f32 %v749, %v750
    %v752 = vsel %vm177, %v745, 0.0
    %v753 = vadd.f32 %v751, %v752
    %v754 = vsel %vm177, %v747, 0.0
    %v755 = vadd.f32 %v753, %v754
    %v756 = vsel %vm177, %v742, 0.0
    %v757 = vsel %vm177, %v744, 0.0
    %v758 = vadd.f32 %v756, %v757
    %v759 = vsel %vm177, %v746, 0.0
    %v760 = vadd.f32 %v758, %v759
    %v761 = vsel %vm177, %v748, 0.0
    %v762 = vadd.f32 %v760, %v761
    %v764 = vsel %vm177, %v755, 0
    %v767 = vsel %vm177, %v762, 0
    %769 = vmatprep.subr.mxu0 0.0
    %770 = vmatpush1.msra.mxu0 0.0
    %771 = vmatprep.subr.mxu0 0.0
    %772 = vmatpush1.msra.mxu0 0.0
    %773 = vmatprep.subr.mxu0 0.0
    %774 = vmatpush1.msra.mxu0 0.0
    %775 = vmatprep.subr.mxu0 0.0
    %776 = vmatpush1.msra.mxu0 0.0
    %777 = vmatprep.subr.mxu0 0.0
    %778 = vmatpush1.msra.mxu0 0.0
    %779 = vmatprep.subr.mxu0 0.0
    %780 = vmatpush1.msra.mxu0 0.0
    %781 = vmatprep.subr.mxu0 0.0
    %782 = vmatpush1.msra.mxu0 0.0
    %783 = vmatprep.subr.mxu0 0.0
    %784 = vmatpush1.msra.mxu0 0.0
    %785 = vmatprep.subr.mxu0 0.0
    %786 = vmatpush1.msra.mxu0 0.0
    %787 = vmatprep.subr.mxu0 0.0
    %788 = vmatpush1.msra.mxu0 0.0
    %789 = vmatprep.subr.mxu0 0.0
    %790 = vmatpush1.msra.mxu0 0.0
    %791 = vmatprep.subr.mxu0 0.0
    %792 = vmatpush1.msra.mxu0 0.0
    %793 = vmatprep.subr.mxu0 0.0
    %794 = vmatpush1.msra.mxu0 %v79
    %795 = vmatprep.subr.mxu0 0.0
    %796 = vmatpush1.msra.mxu0 %v78
    %797 = vmatprep.subr.mxu0 0.0
    %798 = vmatpush1.msra.mxu0 %v77
    %799 = vmatprep.subr.mxu0 0.0
    %800 = vmatpush1.msra.mxu0 %v76
    %801 = vmatprep.subr.mxu0 0.0
    %802 = vmatpush2.msra.mxu0 0.0
    %803 = vmatprep.subr.mxu0 0.0
    %804 = vmatpush2.msra.mxu0 0.0
    %805 = vmatprep.subr.mxu0 0.0
    %806 = vmatpush2.msra.mxu0 0.0
    %807 = vmatprep.subr.mxu0 0.0
    %808 = vmatpush2.msra.mxu0 0.0
    %809 = vmatprep.subr.mxu0 0.0
    %810 = vmatpush2.msra.mxu0 0.0
    %811 = vmatprep.subr.mxu0 0.0
    %812 = vmatpush2.msra.mxu0 0.0
    %813 = vmatprep.subr.mxu0 0.0
    %814 = vmatpush2.msra.mxu0 0.0
    %815 = vmatprep.subr.mxu0 0.0
    %816 = vmatpush2.msra.mxu0 0.0
    %817 = vmatprep.subr.mxu0 0.0
    %818 = vmatpush2.msra.mxu0 0.0
    %819 = vmatprep.subr.mxu0 0.0
    %820 = vmatpush2.msra.mxu0 0.0
    %821 = vmatprep.subr.mxu0 0.0
    %822 = vmatpush2.msra.mxu0 0.0
    %823 = vmatprep.subr.mxu0 0.0
    %824 = vmatpush2.msra.mxu0 0.0
    %825 = vmatprep.subr.mxu0 0.0
    %826 = vmatpush2.msra.mxu0 0.0
    %827 = vmatprep.subr.mxu0 0.0
    %828 = vmatpush2.msra.mxu0 0.0
    %829 = vmatprep.subr.mxu0 0.0
    %830 = vmatpush2.msra.mxu0 0.0
    %831 = vmatprep.subr.mxu0 0.0
    %832 = vmatpush2.msra.mxu0 0.0
    %833 = vmatprep.mubr.f32.mxu0 0.0
    %834 = vmatmul.mubr.f32.gmra.mxu0 %v764
    %v835 = vpop.f32.mrf.mxu0
    %v836 = vadd.f32 0.0, %v835
    %v837 = vpop.f32.mrf.mxu0
    %838 = vmatprep.mubr.f32.mxu0 0.0
    %839 = vmatmul.mubr.f32.gmra.mxu0 %v767
    %v840 = vpop.f32.mrf.mxu0
    %v841 = vadd.f32 0.0, %v840
    %v842 = vpop.f32.mrf.mxu0
    %843 = vdwg.mxu0
    %v846 = vcombine.high %v836, %v836
    %v848 = vunpack.c.l.s4 1983009808
    %v849 = vunpack.c.0.s8 %v848
    %v850 = vlaneseq
    %v851 = vshrl.u32 %v850, 7
    %v852 = vsub.s32 %v849, %v851
    %v853 = vrot.slane %v836, %v852
    %v855 = vunpack.c.l.s4 1983009808
    %v856 = vunpack.c.0.s8 %v855
    %v857 = vlaneseq
    %v858 = vshrl.u32 %v857, 7
    %v859 = vsub.s32 %v856, %v858
    %v860 = vrot.slane %v846, %v859
    %v861 = vcombine.high %v853, %v853
    %v862 = vcombine.high %v860, %v860
    %v863 = vcombine.high %v841, %v841
    %v865 = vunpack.c.l.s4 1983009808
    %v866 = vunpack.c.0.s8 %v865
    %v867 = vlaneseq
    %v868 = vshrl.u32 %v867, 7
    %v869 = vsub.s32 %v866, %v868
    %v870 = vrot.slane %v841, %v869
    %v872 = vunpack.c.l.s4 1983009808
    %v873 = vunpack.c.0.s8 %v872
    %v874 = vlaneseq
    %v875 = vshrl.u32 %v874, 7
    %v876 = vsub.s32 %v873, %v875
    %v877 = vrot.slane %v863, %v876
    %v878 = vcombine.high %v870, %v870
    %v879 = vcombine.high %v877, %v877
    %v888 = vadd.f32 %v56, %v853
    %v889 = vadd.f32 %v57, %v861
    %v890 = vadd.f32 %v58, %v860
    %v891 = vadd.f32 %v59, %v862
    %v892 = vadd.f32 %v60, %v870
    %v893 = vadd.f32 %v61, %v878
    %v894 = vadd.f32 %v62, %v877
    %v895 = vadd.f32 %v63, %v879
    %v896 = vlaneseq
    %v897 = vshrl.u32 %v896, 7
    %v898 = vsub.s32 1, %v897
    %v899 = vrot.slane %v92, %v898
    %v901 = vcombine.high %v899, %v899
    %v903 = vunpack.c.l.s4 1983009808
    %v904 = vunpack.c.0.s8 %v903
    %v905 = vlaneseq
    %v906 = vshrl.u32 %v905, 7
    %v907 = vsub.s32 %v904, %v906
    %v908 = vrot.slane %v899, %v907
    %v910 = vunpack.c.l.s4 1983009808
    %v911 = vunpack.c.0.s8 %v910
    %v912 = vlaneseq
    %v913 = vshrl.u32 %v912, 7
    %v914 = vsub.s32 %v911, %v913
    %v915 = vrot.slane %v901, %v914
    %v916 = vcombine.high %v908, %v908
    %v917 = vcombine.high %v915, %v915
    %v922 = vadd.f32 %v888, %v908
    %v923 = vadd.f32 %v889, %v916
    %v924 = vadd.f32 %v890, %v915
    %v925 = vadd.f32 %v891, %v917
    %v926 = vadd.f32 %v892, %v908
    %v927 = vadd.f32 %v893, %v916
    %v928 = vadd.f32 %v894, %v915
    %v929 = vadd.f32 %v895, %v917
    %v938 = vcombine.low %v922, %v923
    %v939 = vcombine.low %v924, %v925
    %v941 = vunpack.c.l.s4 1983009808
    %v942 = vunpack.c.0.s8 %v941
    %v943 = vlaneseq
    %v944 = vshrl.u32 %v943, 7
    %v945 = vsub.s32 %v942, %v944
    %v946 = vrot.slane %v938, %v945
    %v948 = vunpack.c.l.s4 1983009808
    %v949 = vunpack.c.0.s8 %v948
    %v950 = vlaneseq
    %v951 = vshrl.u32 %v950, 7
    %v952 = vsub.s32 %v949, %v951
    %v953 = vrot.slane %v939, %v952
    %v954 = vcombine.low %v946, %v953
    %v955 = vcombine.low %v926, %v927
    %v956 = vcombine.low %v928, %v929
    %v958 = vunpack.c.l.s4 1983009808
    %v959 = vunpack.c.0.s8 %v958
    %v960 = vlaneseq
    %v961 = vshrl.u32 %v960, 7
    %v962 = vsub.s32 %v959, %v961
    %v963 = vrot.slane %v955, %v962
    %v965 = vunpack.c.l.s4 1983009808
    %v966 = vunpack.c.0.s8 %v965
    %v967 = vlaneseq
    %v968 = vshrl.u32 %v967, 7
    %v969 = vsub.s32 %v966, %v968
    %v970 = vrot.slane %v956, %v969
    %v971 = vcombine.low %v963, %v970
    %v974 = vsel %vm177, %v954, 0.0
    %975 = vadd.xlane.f32.xlu0 %v974
    %v976 = vpop.xlane.xlu0 %975
    %v977 = vsel %vm177, %v971, 0.0
    %978 = vadd.xlane.f32.xlu0 %v977
    %v979 = vpop.xlane.xlu0 %978
    %v980 = vrcp.pop 32.0
    %v981 = vmul.f32 %v976, %v980
    %v982 = vmul.f32 %v979, %v980
    %v986 = vunpack.c.l.s4 269488144
    %v987 = vunpack.c.0.s8 %v986
    %v988 = vlaneseq
    %v989 = vshrl.u32 %v988, 7
    %v990 = vsub.s32 %v987, %v989
    %v991 = vrot.slane %v981, %v990
    %v993 = vunpack.c.l.s4 842150450
    %v994 = vunpack.c.0.s8 %v993
    %v995 = vlaneseq
    %v996 = vshrl.u32 %v995, 7
    %v997 = vsub.s32 %v994, %v996
    %v998 = vrot.slane %v981, %v997
    %v1000 = vunpack.c.l.s4 1414812756
    %v1001 = vunpack.c.0.s8 %v1000
    %v1002 = vlaneseq
    %v1003 = vshrl.u32 %v1002, 7
    %v1004 = vsub.s32 %v1001, %v1003
    %v1005 = vrot.slane %v981, %v1004
    %v1007 = vunpack.c.l.s4 1987475062
    %v1008 = vunpack.c.0.s8 %v1007
    %v1009 = vlaneseq
    %v1010 = vshrl.u32 %v1009, 7
    %v1011 = vsub.s32 %v1008, %v1010
    %v1012 = vrot.slane %v981, %v1011
    %v1014 = vunpack.c.l.s4 269488144
    %v1015 = vunpack.c.0.s8 %v1014
    %v1016 = vlaneseq
    %v1017 = vshrl.u32 %v1016, 7
    %v1018 = vsub.s32 %v1015, %v1017
    %v1019 = vrot.slane %v982, %v1018
    %v1021 = vunpack.c.l.s4 842150450
    %v1022 = vunpack.c.0.s8 %v1021
    %v1023 = vlaneseq
    %v1024 = vshrl.u32 %v1023, 7
    %v1025 = vsub.s32 %v1022, %v1024
    %v1026 = vrot.slane %v982, %v1025
    %v1028 = vunpack.c.l.s4 1414812756
    %v1029 = vunpack.c.0.s8 %v1028
    %v1030 = vlaneseq
    %v1031 = vshrl.u32 %v1030, 7
    %v1032 = vsub.s32 %v1029, %v1031
    %v1033 = vrot.slane %v982, %v1032
    %v1035 = vunpack.c.l.s4 1987475062
    %v1036 = vunpack.c.0.s8 %v1035
    %v1037 = vlaneseq
    %v1038 = vshrl.u32 %v1037, 7
    %v1039 = vsub.s32 %v1036, %v1038
    %v1040 = vrot.slane %v982, %v1039
    %v1049 = vsub.f32 %v922, %v991
    %v1050 = vsub.f32 %v923, %v998
    %v1051 = vsub.f32 %v924, %v1005
    %v1052 = vsub.f32 %v925, %v1012
    %v1053 = vsub.f32 %v926, %v1019
    %v1054 = vsub.f32 %v927, %v1026
    %v1055 = vsub.f32 %v928, %v1033
    %v1056 = vsub.f32 %v929, %v1040
    %v1057 = vmul.f32 %v1049, %v1049
    %v1058 = vmul.f32 %v1050, %v1050
    %v1059 = vmul.f32 %v1051, %v1051
    %v1060 = vmul.f32 %v1052, %v1052
    %v1061 = vmul.f32 %v1053, %v1053
    %v1062 = vmul.f32 %v1054, %v1054
    %v1063 = vmul.f32 %v1055, %v1055
    %v1064 = vmul.f32 %v1056, %v1056
    %v1073 = vcombine.low %v1057, %v1058
    %v1074 = vcombine.low %v1059, %v1060
    %v1076 = vunpack.c.l.s4 1983009808
    %v1077 = vunpack.c.0.s8 %v1076
    %v1078 = vlaneseq
    %v1079 = vshrl.u32 %v1078, 7
    %v1080 = vsub.s32 %v1077, %v1079
    %v1081 = vrot.slane %v1073, %v1080
    %v1083 = vunpack.c.l.s4 1983009808
    %v1084 = vunpack.c.0.s8 %v1083
    %v1085 = vlaneseq
    %v1086 = vshrl.u32 %v1085, 7
    %v1087 = vsub.s32 %v1084, %v1086
    %v1088 = vrot.slane %v1074, %v1087
    %v1089 = vcombine.low %v1081, %v1088
    %v1090 = vcombine.low %v1061, %v1062
    %v1091 = vcombine.low %v1063, %v1064
    %v1093 = vunpack.c.l.s4 1983009808
    %v1094 = vunpack.c.0.s8 %v1093
    %v1095 = vlaneseq
    %v1096 = vshrl.u32 %v1095, 7
    %v1097 = vsub.s32 %v1094, %v1096
    %v1098 = vrot.slane %v1090, %v1097
    %v1100 = vunpack.c.l.s4 1983009808
    %v1101 = vunpack.c.0.s8 %v1100
    %v1102 = vlaneseq
    %v1103 = vshrl.u32 %v1102, 7
    %v1104 = vsub.s32 %v1101, %v1103
    %v1105 = vrot.slane %v1091, %v1104
    %v1106 = vcombine.low %v1098, %v1105
    %v1109 = vsel %vm177, %v1089, 0.0
    %1110 = vadd.xlane.f32.xlu0 %v1109
    %v1111 = vpop.xlane.xlu0 %1110
    %v1112 = vsel %vm177, %v1106, 0.0
    %1113 = vadd.xlane.f32.xlu0 %v1112
    %v1114 = vpop.xlane.xlu0 %1113
    %v1115 = vmul.f32 %v1111, %v980
    %v1116 = vmul.f32 %v1114, %v980
    %v1117 = vadd.f32 %v1115, 1e-05
    %v1118 = vadd.f32 %v1116, 1e-05
    %v1119 = vrsqrt.pop %v1117
    %v1120 = vrsqrt.pop %v1118
    %v1124 = vunpack.c.l.s4 269488144
    %v1125 = vunpack.c.0.s8 %v1124
    %v1126 = vlaneseq
    %v1127 = vshrl.u32 %v1126, 7
    %v1128 = vsub.s32 %v1125, %v1127
    %v1129 = vrot.slane %v1119, %v1128
    %v1131 = vunpack.c.l.s4 842150450
    %v1132 = vunpack.c.0.s8 %v1131
    %v1133 = vlaneseq
    %v1134 = vshrl.u32 %v1133, 7
    %v1135 = vsub.s32 %v1132, %v1134
    %v1136 = vrot.slane %v1119, %v1135
    %v1138 = vunpack.c.l.s4 1414812756
    %v1139 = vunpack.c.0.s8 %v1138
    %v1140 = vlaneseq
    %v1141 = vshrl.u32 %v1140, 7
    %v1142 = vsub.s32 %v1139, %v1141
    %v1143 = vrot.slane %v1119, %v1142
    %v1145 = vunpack.c.l.s4 1987475062
    %v1146 = vunpack.c.0.s8 %v1145
    %v1147 = vlaneseq
    %v1148 = vshrl.u32 %v1147, 7
    %v1149 = vsub.s32 %v1146, %v1148
    %v1150 = vrot.slane %v1119, %v1149
    %v1152 = vunpack.c.l.s4 269488144
    %v1153 = vunpack.c.0.s8 %v1152
    %v1154 = vlaneseq
    %v1155 = vshrl.u32 %v1154, 7
    %v1156 = vsub.s32 %v1153, %v1155
    %v1157 = vrot.slane %v1120, %v1156
    %v1159 = vunpack.c.l.s4 842150450
    %v1160 = vunpack.c.0.s8 %v1159
    %v1161 = vlaneseq
    %v1162 = vshrl.u32 %v1161, 7
    %v1163 = vsub.s32 %v1160, %v1162
    %v1164 = vrot.slane %v1120, %v1163
    %v1166 = vunpack.c.l.s4 1414812756
    %v1167 = vunpack.c.0.s8 %v1166
    %v1168 = vlaneseq
    %v1169 = vshrl.u32 %v1168, 7
    %v1170 = vsub.s32 %v1167, %v1169
    %v1171 = vrot.slane %v1120, %v1170
    %v1173 = vunpack.c.l.s4 1987475062
    %v1174 = vunpack.c.0.s8 %v1173
    %v1175 = vlaneseq
    %v1176 = vshrl.u32 %v1175, 7
    %v1177 = vsub.s32 %v1174, %v1176
    %v1178 = vrot.slane %v1120, %v1177
    %v1187 = vmul.f32 %v1049, %v1129
    %v1188 = vmul.f32 %v1050, %v1136
    %v1189 = vmul.f32 %v1051, %v1143
    %v1190 = vmul.f32 %v1052, %v1150
    %v1191 = vmul.f32 %v1053, %v1157
    %v1192 = vmul.f32 %v1054, %v1164
    %v1193 = vmul.f32 %v1055, %v1171
    %v1194 = vmul.f32 %v1056, %v1178
    %v1195 = vlaneseq
    %v1196 = vshrl.u32 %v1195, 7
    %v1197 = vsub.s32 4, %v1196
    %v1198 = vrot.slane %v92, %v1197
    %v1200 = vcombine.high %v1198, %v1198
    %v1202 = vunpack.c.l.s4 1983009808
    %v1203 = vunpack.c.0.s8 %v1202
    %v1204 = vlaneseq
    %v1205 = vshrl.u32 %v1204, 7
    %v1206 = vsub.s32 %v1203, %v1205
    %v1207 = vrot.slane %v1198, %v1206
    %v1209 = vunpack.c.l.s4 1983009808
    %v1210 = vunpack.c.0.s8 %v1209
    %v1211 = vlaneseq
    %v1212 = vshrl.u32 %v1211, 7
    %v1213 = vsub.s32 %v1210, %v1212
    %v1214 = vrot.slane %v1200, %v1213
    %v1215 = vcombine.high %v1207, %v1207
    %v1216 = vcombine.high %v1214, %v1214
    %v1221 = vmul.f32 %v1187, %v1207
    %v1222 = vmul.f32 %v1188, %v1215
    %v1223 = vmul.f32 %v1189, %v1214
    %v1224 = vmul.f32 %v1190, %v1216
    %v1225 = vmul.f32 %v1191, %v1207
    %v1226 = vmul.f32 %v1192, %v1215
    %v1227 = vmul.f32 %v1193, %v1214
    %v1228 = vmul.f32 %v1194, %v1216
    %v1229 = vlaneseq
    %v1230 = vshrl.u32 %v1229, 7
    %v1231 = vsub.s32 5, %v1230
    %v1232 = vrot.slane %v92, %v1231
    %v1234 = vcombine.high %v1232, %v1232
    %v1236 = vunpack.c.l.s4 1983009808
    %v1237 = vunpack.c.0.s8 %v1236
    %v1238 = vlaneseq
    %v1239 = vshrl.u32 %v1238, 7
    %v1240 = vsub.s32 %v1237, %v1239
    %v1241 = vrot.slane %v1232, %v1240
    %v1243 = vunpack.c.l.s4 1983009808
    %v1244 = vunpack.c.0.s8 %v1243
    %v1245 = vlaneseq
    %v1246 = vshrl.u32 %v1245, 7
    %v1247 = vsub.s32 %v1244, %v1246
    %v1248 = vrot.slane %v1234, %v1247
    %v1249 = vcombine.high %v1241, %v1241
    %v1250 = vcombine.high %v1248, %v1248
    %v1255 = vadd.f32 %v1221, %v1241
    %v1256 = vadd.f32 %v1222, %v1249
    %v1257 = vadd.f32 %v1223, %v1248
    %v1258 = vadd.f32 %v1224, %v1250
    %v1259 = vadd.f32 %v1225, %v1241
    %v1260 = vadd.f32 %v1226, %v1249
    %v1261 = vadd.f32 %v1227, %v1248
    %v1262 = vadd.f32 %v1228, %v1250
    %v1263 = vlaneseq
    %v1264 = vshrl.u32 %v1263, 7
    %v1265 = vsub.s32 2, %v1264
    %v1266 = vrot.slane %v92, %v1265
    %v1275 = vcombine.low %v1255, %v1256
    %v1276 = vcombine.low %v1257, %v1258
    %v1278 = vunpack.c.l.s4 1983009808
    %v1279 = vunpack.c.0.s8 %v1278
    %v1280 = vlaneseq
    %v1281 = vshrl.u32 %v1280, 7
    %v1282 = vsub.s32 %v1279, %v1281
    %v1283 = vrot.slane %v1275, %v1282
    %v1285 = vunpack.c.l.s4 1983009808
    %v1286 = vunpack.c.0.s8 %v1285
    %v1287 = vlaneseq
    %v1288 = vshrl.u32 %v1287, 7
    %v1289 = vsub.s32 %v1286, %v1288
    %v1290 = vrot.slane %v1276, %v1289
    %v1291 = vcombine.low %v1283, %v1290
    %v1292 = vcombine.low %v1259, %v1260
    %v1293 = vcombine.low %v1261, %v1262
    %v1295 = vunpack.c.l.s4 1983009808
    %v1296 = vunpack.c.0.s8 %v1295
    %v1297 = vlaneseq
    %v1298 = vshrl.u32 %v1297, 7
    %v1299 = vsub.s32 %v1296, %v1298
    %v1300 = vrot.slane %v1292, %v1299
    %v1302 = vunpack.c.l.s4 1983009808
    %v1303 = vunpack.c.0.s8 %v1302
    %v1304 = vlaneseq
    %v1305 = vshrl.u32 %v1304, 7
    %v1306 = vsub.s32 %v1303, %v1305
    %v1307 = vrot.slane %v1293, %v1306
    %v1308 = vcombine.low %v1300, %v1307
    %v1309 = vsel %vm177, %v1291, 0
    %v1311 = vsel %vm177, %v1308, 0
    %1313 = vmatprep.subr.mxu0 0.0
    %1314 = vmatpush1.msra.mxu0 0.0
    %1315 = vmatprep.subr.mxu0 0.0
    %1316 = vmatpush1.msra.mxu0 0.0
    %1317 = vmatprep.subr.mxu0 0.0
    %1318 = vmatpush1.msra.mxu0 0.0
    %1319 = vmatprep.subr.mxu0 0.0
    %1320 = vmatpush1.msra.mxu0 0.0
    %1321 = vmatprep.subr.mxu0 0.0
    %1322 = vmatpush1.msra.mxu0 0.0
    %1323 = vmatprep.subr.mxu0 0.0
    %1324 = vmatpush1.msra.mxu0 0.0
    %1325 = vmatprep.subr.mxu0 0.0
    %1326 = vmatpush1.msra.mxu0 0.0
    %1327 = vmatprep.subr.mxu0 0.0
    %1328 = vmatpush1.msra.mxu0 0.0
    %1329 = vmatprep.subr.mxu0 0.0
    %1330 = vmatpush1.msra.mxu0 0.0
    %1331 = vmatprep.subr.mxu0 0.0
    %1332 = vmatpush1.msra.mxu0 0.0
    %1333 = vmatprep.subr.mxu0 0.0
    %1334 = vmatpush1.msra.mxu0 0.0
    %1335 = vmatprep.subr.mxu0 0.0
    %1336 = vmatpush1.msra.mxu0 0.0
    %1337 = vmatprep.subr.mxu0 0.0
    %1338 = vmatpush1.msra.mxu0 %v83
    %1339 = vmatprep.subr.mxu0 0.0
    %1340 = vmatpush1.msra.mxu0 %v82
    %1341 = vmatprep.subr.mxu0 0.0
    %1342 = vmatpush1.msra.mxu0 %v81
    %1343 = vmatprep.subr.mxu0 0.0
    %1344 = vmatpush1.msra.mxu0 %v80
    %1345 = vmatprep.subr.mxu0 0.0
    %1346 = vmatpush2.msra.mxu0 0.0
    %1347 = vmatprep.subr.mxu0 0.0
    %1348 = vmatpush2.msra.mxu0 0.0
    %1349 = vmatprep.subr.mxu0 0.0
    %1350 = vmatpush2.msra.mxu0 0.0
    %1351 = vmatprep.subr.mxu0 0.0
    %1352 = vmatpush2.msra.mxu0 0.0
    %1353 = vmatprep.subr.mxu0 0.0
    %1354 = vmatpush2.msra.mxu0 0.0
    %1355 = vmatprep.subr.mxu0 0.0
    %1356 = vmatpush2.msra.mxu0 0.0
    %1357 = vmatprep.subr.mxu0 0.0
    %1358 = vmatpush2.msra.mxu0 0.0
    %1359 = vmatprep.subr.mxu0 0.0
    %1360 = vmatpush2.msra.mxu0 0.0
    %1361 = vmatprep.subr.mxu0 0.0
    %1362 = vmatpush2.msra.mxu0 0.0
    %1363 = vmatprep.subr.mxu0 0.0
    %1364 = vmatpush2.msra.mxu0 0.0
    %1365 = vmatprep.subr.mxu0 0.0
    %1366 = vmatpush2.msra.mxu0 0.0
    %1367 = vmatprep.subr.mxu0 0.0
    %1368 = vmatpush2.msra.mxu0 0.0
    %1369 = vmatprep.subr.mxu0 0.0
    %1370 = vmatpush2.msra.mxu0 0.0
    %1371 = vmatprep.subr.mxu0 0.0
    %1372 = vmatpush2.msra.mxu0 0.0
    %1373 = vmatprep.subr.mxu0 0.0
    %1374 = vmatpush2.msra.mxu0 0.0
    %1375 = vmatprep.subr.mxu0 0.0
    %1376 = vmatpush2.msra.mxu0 0.0
    %1377 = vmatprep.mubr.f32.mxu0 0.0
    %1378 = vmatmul.mubr.f32.gmra.mxu0 %v1309
    %v1379 = vpop.f32.mrf.mxu0
    %v1380 = vadd.f32 %v1266, %v1379
    %v1381 = vpop.f32.mrf.mxu0
    %1382 = vmatprep.mubr.f32.mxu0 0.0
    %1383 = vmatmul.mubr.f32.gmra.mxu0 %v1311
    %v1384 = vpop.f32.mrf.mxu0
    %v1385 = vadd.f32 %v1266, %v1384
    %v1386 = vpop.f32.mrf.mxu0
    %1387 = vdwg.mxu0
    %v1388 = vmax.f32 %v1380, 0.0
    %v1389 = vmax.f32 %v1385, 0.0
    %vm1390 = vcmask 523264
    %v1392 = vsel %vm1390, %v1388, 0
    %v1395 = vsel %vm1390, %v1389, 0
    %1397 = vmatprep.subr.mxu0 0.0
    %1398 = vmatpush1.msra.mxu0 0.0
    %1399 = vmatprep.subr.mxu0 0.0
    %1400 = vmatpush1.msra.mxu0 0.0
    %1401 = vmatprep.subr.mxu0 0.0
    %1402 = vmatpush1.msra.mxu0 0.0
    %1403 = vmatprep.subr.mxu0 0.0
    %1404 = vmatpush1.msra.mxu0 0.0
    %1405 = vmatprep.subr.mxu0 0.0
    %1406 = vmatpush1.msra.mxu0 0.0
    %1407 = vmatprep.subr.mxu0 0.0
    %1408 = vmatpush1.msra.mxu0 0.0
    %1409 = vmatprep.subr.mxu0 0.0
    %1410 = vmatpush1.msra.mxu0 0.0
    %1411 = vmatprep.subr.mxu0 0.0
    %1412 = vmatpush1.msra.mxu0 0.0
    %1413 = vmatprep.subr.mxu0 0.0
    %1414 = vmatpush1.msra.mxu0 %v91
    %1415 = vmatprep.subr.mxu0 0.0
    %1416 = vmatpush1.msra.mxu0 %v90
    %1417 = vmatprep.subr.mxu0 0.0
    %1418 = vmatpush1.msra.mxu0 %v89
    %1419 = vmatprep.subr.mxu0 0.0
    %1420 = vmatpush1.msra.mxu0 %v88
    %1421 = vmatprep.subr.mxu0 0.0
    %1422 = vmatpush1.msra.mxu0 %v87
    %1423 = vmatprep.subr.mxu0 0.0
    %1424 = vmatpush1.msra.mxu0 %v86
    %1425 = vmatprep.subr.mxu0 0.0
    %1426 = vmatpush1.msra.mxu0 %v85
    %1427 = vmatprep.subr.mxu0 0.0
    %1428 = vmatpush1.msra.mxu0 %v84
    %1429 = vmatprep.subr.mxu0 0.0
    %1430 = vmatpush2.msra.mxu0 0.0
    %1431 = vmatprep.subr.mxu0 0.0
    %1432 = vmatpush2.msra.mxu0 0.0
    %1433 = vmatprep.subr.mxu0 0.0
    %1434 = vmatpush2.msra.mxu0 0.0
    %1435 = vmatprep.subr.mxu0 0.0
    %1436 = vmatpush2.msra.mxu0 0.0
    %1437 = vmatprep.subr.mxu0 0.0
    %1438 = vmatpush2.msra.mxu0 0.0
    %1439 = vmatprep.subr.mxu0 0.0
    %1440 = vmatpush2.msra.mxu0 0.0
    %1441 = vmatprep.subr.mxu0 0.0
    %1442 = vmatpush2.msra.mxu0 0.0
    %1443 = vmatprep.subr.mxu0 0.0
    %1444 = vmatpush2.msra.mxu0 0.0
    %1445 = vmatprep.subr.mxu0 0.0
    %1446 = vmatpush2.msra.mxu0 0.0
    %1447 = vmatprep.subr.mxu0 0.0
    %1448 = vmatpush2.msra.mxu0 0.0
    %1449 = vmatprep.subr.mxu0 0.0
    %1450 = vmatpush2.msra.mxu0 0.0
    %1451 = vmatprep.subr.mxu0 0.0
    %1452 = vmatpush2.msra.mxu0 0.0
    %1453 = vmatprep.subr.mxu0 0.0
    %1454 = vmatpush2.msra.mxu0 0.0
    %1455 = vmatprep.subr.mxu0 0.0
    %1456 = vmatpush2.msra.mxu0 0.0
    %1457 = vmatprep.subr.mxu0 0.0
    %1458 = vmatpush2.msra.mxu0 0.0
    %1459 = vmatprep.subr.mxu0 0.0
    %1460 = vmatpush2.msra.mxu0 0.0
    %1461 = vmatprep.mubr.f32.mxu0 0.0
    %1462 = vmatmul.mubr.f32.gmra.mxu0 %v1392
    %v1463 = vpop.f32.mrf.mxu0
    %v1464 = vadd.f32 0.0, %v1463
    %v1465 = vpop.f32.mrf.mxu0
    %1466 = vmatprep.mubr.f32.mxu0 0.0
    %1467 = vmatmul.mubr.f32.gmra.mxu0 %v1395
    %v1468 = vpop.f32.mrf.mxu0
    %v1469 = vadd.f32 0.0, %v1468
    %v1470 = vpop.f32.mrf.mxu0
    %1471 = vdwg.mxu0
    %v1474 = vcombine.high %v1464, %v1464
    %v1476 = vunpack.c.l.s4 1983009808
    %v1477 = vunpack.c.0.s8 %v1476
    %v1478 = vlaneseq
    %v1479 = vshrl.u32 %v1478, 7
    %v1480 = vsub.s32 %v1477, %v1479
    %v1481 = vrot.slane %v1464, %v1480
    %v1483 = vunpack.c.l.s4 1983009808
    %v1484 = vunpack.c.0.s8 %v1483
    %v1485 = vlaneseq
    %v1486 = vshrl.u32 %v1485, 7
    %v1487 = vsub.s32 %v1484, %v1486
    %v1488 = vrot.slane %v1474, %v1487
    %v1489 = vcombine.high %v1481, %v1481
    %v1490 = vcombine.high %v1488, %v1488
    %v1491 = vcombine.high %v1469, %v1469
    %v1493 = vunpack.c.l.s4 1983009808
    %v1494 = vunpack.c.0.s8 %v1493
    %v1495 = vlaneseq
    %v1496 = vshrl.u32 %v1495, 7
    %v1497 = vsub.s32 %v1494, %v1496
    %v1498 = vrot.slane %v1469, %v1497
    %v1500 = vunpack.c.l.s4 1983009808
    %v1501 = vunpack.c.0.s8 %v1500
    %v1502 = vlaneseq
    %v1503 = vshrl.u32 %v1502, 7
    %v1504 = vsub.s32 %v1501, %v1503
    %v1505 = vrot.slane %v1491, %v1504
    %v1506 = vcombine.high %v1498, %v1498
    %v1507 = vcombine.high %v1505, %v1505
    %v1516 = vadd.f32 %v1255, %v1481
    %v1517 = vadd.f32 %v1256, %v1489
    %v1518 = vadd.f32 %v1257, %v1488
    %v1519 = vadd.f32 %v1258, %v1490
    %v1520 = vadd.f32 %v1259, %v1498
    %v1521 = vadd.f32 %v1260, %v1506
    %v1522 = vadd.f32 %v1261, %v1505
    %v1523 = vadd.f32 %v1262, %v1507
    %v1524 = vlaneseq
    %v1525 = vshrl.u32 %v1524, 7
    %v1526 = vsub.s32 3, %v1525
    %v1527 = vrot.slane %v92, %v1526
    %v1529 = vcombine.high %v1527, %v1527
    %v1531 = vunpack.c.l.s4 1983009808
    %v1532 = vunpack.c.0.s8 %v1531
    %v1533 = vlaneseq
    %v1534 = vshrl.u32 %v1533, 7
    %v1535 = vsub.s32 %v1532, %v1534
    %v1536 = vrot.slane %v1527, %v1535
    %v1538 = vunpack.c.l.s4 1983009808
    %v1539 = vunpack.c.0.s8 %v1538
    %v1540 = vlaneseq
    %v1541 = vshrl.u32 %v1540, 7
    %v1542 = vsub.s32 %v1539, %v1541
    %v1543 = vrot.slane %v1529, %v1542
    %v1544 = vcombine.high %v1536, %v1536
    %v1545 = vcombine.high %v1543, %v1543
    %v1550 = vadd.f32 %v1516, %v1536
    %v1551 = vadd.f32 %v1517, %v1544
    %v1552 = vadd.f32 %v1518, %v1543
    %v1553 = vadd.f32 %v1519, %v1545
    %v1554 = vadd.f32 %v1520, %v1536
    %v1555 = vadd.f32 %v1521, %v1544
    %v1556 = vadd.f32 %v1522, %v1543
    %v1557 = vadd.f32 %v1523, %v1545
    %v1566 = vcombine.low %v1550, %v1551
    %v1567 = vcombine.low %v1552, %v1553
    %v1569 = vunpack.c.l.s4 1983009808
    %v1570 = vunpack.c.0.s8 %v1569
    %v1571 = vlaneseq
    %v1572 = vshrl.u32 %v1571, 7
    %v1573 = vsub.s32 %v1570, %v1572
    %v1574 = vrot.slane %v1566, %v1573
    %v1576 = vunpack.c.l.s4 1983009808
    %v1577 = vunpack.c.0.s8 %v1576
    %v1578 = vlaneseq
    %v1579 = vshrl.u32 %v1578, 7
    %v1580 = vsub.s32 %v1577, %v1579
    %v1581 = vrot.slane %v1567, %v1580
    %v1582 = vcombine.low %v1574, %v1581
    %v1583 = vcombine.low %v1554, %v1555
    %v1584 = vcombine.low %v1556, %v1557
    %v1586 = vunpack.c.l.s4 1983009808
    %v1587 = vunpack.c.0.s8 %v1586
    %v1588 = vlaneseq
    %v1589 = vshrl.u32 %v1588, 7
    %v1590 = vsub.s32 %v1587, %v1589
    %v1591 = vrot.slane %v1583, %v1590
    %v1593 = vunpack.c.l.s4 1983009808
    %v1594 = vunpack.c.0.s8 %v1593
    %v1595 = vlaneseq
    %v1596 = vshrl.u32 %v1595, 7
    %v1597 = vsub.s32 %v1594, %v1596
    %v1598 = vrot.slane %v1584, %v1597
    %v1599 = vcombine.low %v1591, %v1598
    %v1602 = vsel %vm177, %v1582, 0.0
    %1603 = vadd.xlane.f32.xlu0 %v1602
    %v1604 = vpop.xlane.xlu0 %1603
    %v1605 = vsel %vm177, %v1599, 0.0
    %1606 = vadd.xlane.f32.xlu0 %v1605
    %v1607 = vpop.xlane.xlu0 %1606
    %v1608 = vmul.f32 %v1604, %v980
    %v1609 = vmul.f32 %v1607, %v980
    %v1613 = vunpack.c.l.s4 269488144
    %v1614 = vunpack.c.0.s8 %v1613
    %v1615 = vlaneseq
    %v1616 = vshrl.u32 %v1615, 7
    %v1617 = vsub.s32 %v1614, %v1616
    %v1618 = vrot.slane %v1608, %v1617
    %v1620 = vunpack.c.l.s4 842150450
    %v1621 = vunpack.c.0.s8 %v1620
    %v1622 = vlaneseq
    %v1623 = vshrl.u32 %v1622, 7
    %v1624 = vsub.s32 %v1621, %v1623
    %v1625 = vrot.slane %v1608, %v1624
    %v1627 = vunpack.c.l.s4 1414812756
    %v1628 = vunpack.c.0.s8 %v1627
    %v1629 = vlaneseq
    %v1630 = vshrl.u32 %v1629, 7
    %v1631 = vsub.s32 %v1628, %v1630
    %v1632 = vrot.slane %v1608, %v1631
    %v1634 = vunpack.c.l.s4 1987475062
    %v1635 = vunpack.c.0.s8 %v1634
    %v1636 = vlaneseq
    %v1637 = vshrl.u32 %v1636, 7
    %v1638 = vsub.s32 %v1635, %v1637
    %v1639 = vrot.slane %v1608, %v1638
    %v1641 = vunpack.c.l.s4 269488144
    %v1642 = vunpack.c.0.s8 %v1641
    %v1643 = vlaneseq
    %v1644 = vshrl.u32 %v1643, 7
    %v1645 = vsub.s32 %v1642, %v1644
    %v1646 = vrot.slane %v1609, %v1645
    %v1648 = vunpack.c.l.s4 842150450
    %v1649 = vunpack.c.0.s8 %v1648
    %v1650 = vlaneseq
    %v1651 = vshrl.u32 %v1650, 7
    %v1652 = vsub.s32 %v1649, %v1651
    %v1653 = vrot.slane %v1609, %v1652
    %v1655 = vunpack.c.l.s4 1414812756
    %v1656 = vunpack.c.0.s8 %v1655
    %v1657 = vlaneseq
    %v1658 = vshrl.u32 %v1657, 7
    %v1659 = vsub.s32 %v1656, %v1658
    %v1660 = vrot.slane %v1609, %v1659
    %v1662 = vunpack.c.l.s4 1987475062
    %v1663 = vunpack.c.0.s8 %v1662
    %v1664 = vlaneseq
    %v1665 = vshrl.u32 %v1664, 7
    %v1666 = vsub.s32 %v1663, %v1665
    %v1667 = vrot.slane %v1609, %v1666
    %v1676 = vsub.f32 %v1550, %v1618
    %v1677 = vsub.f32 %v1551, %v1625
    %v1678 = vsub.f32 %v1552, %v1632
    %v1679 = vsub.f32 %v1553, %v1639
    %v1680 = vsub.f32 %v1554, %v1646
    %v1681 = vsub.f32 %v1555, %v1653
    %v1682 = vsub.f32 %v1556, %v1660
    %v1683 = vsub.f32 %v1557, %v1667
    %v1684 = vmul.f32 %v1676, %v1676
    %v1685 = vmul.f32 %v1677, %v1677
    %v1686 = vmul.f32 %v1678, %v1678
    %v1687 = vmul.f32 %v1679, %v1679
    %v1688 = vmul.f32 %v1680, %v1680
    %v1689 = vmul.f32 %v1681, %v1681
    %v1690 = vmul.f32 %v1682, %v1682
    %v1691 = vmul.f32 %v1683, %v1683
    %v1700 = vcombine.low %v1684, %v1685
    %v1701 = vcombine.low %v1686, %v1687
    %v1703 = vunpack.c.l.s4 1983009808
    %v1704 = vunpack.c.0.s8 %v1703
    %v1705 = vlaneseq
    %v1706 = vshrl.u32 %v1705, 7
    %v1707 = vsub.s32 %v1704, %v1706
    %v1708 = vrot.slane %v1700, %v1707
    %v1710 = vunpack.c.l.s4 1983009808
    %v1711 = vunpack.c.0.s8 %v1710
    %v1712 = vlaneseq
    %v1713 = vshrl.u32 %v1712, 7
    %v1714 = vsub.s32 %v1711, %v1713
    %v1715 = vrot.slane %v1701, %v1714
    %v1716 = vcombine.low %v1708, %v1715
    %v1717 = vcombine.low %v1688, %v1689
    %v1718 = vcombine.low %v1690, %v1691
    %v1720 = vunpack.c.l.s4 1983009808
    %v1721 = vunpack.c.0.s8 %v1720
    %v1722 = vlaneseq
    %v1723 = vshrl.u32 %v1722, 7
    %v1724 = vsub.s32 %v1721, %v1723
    %v1725 = vrot.slane %v1717, %v1724
    %v1727 = vunpack.c.l.s4 1983009808
    %v1728 = vunpack.c.0.s8 %v1727
    %v1729 = vlaneseq
    %v1730 = vshrl.u32 %v1729, 7
    %v1731 = vsub.s32 %v1728, %v1730
    %v1732 = vrot.slane %v1718, %v1731
    %v1733 = vcombine.low %v1725, %v1732
    %v1736 = vsel %vm177, %v1716, 0.0
    %1737 = vadd.xlane.f32.xlu0 %v1736
    %v1738 = vpop.xlane.xlu0 %1737
    %v1739 = vsel %vm177, %v1733, 0.0
    %1740 = vadd.xlane.f32.xlu0 %v1739
    %v1741 = vpop.xlane.xlu0 %1740
    %v1742 = vmul.f32 %v1738, %v980
    %v1743 = vmul.f32 %v1741, %v980
    %v1744 = vadd.f32 %v1742, 1e-05
    %v1745 = vadd.f32 %v1743, 1e-05
    %v1746 = vrsqrt.pop %v1744
    %v1747 = vrsqrt.pop %v1745
    %v1751 = vunpack.c.l.s4 269488144
    %v1752 = vunpack.c.0.s8 %v1751
    %v1753 = vlaneseq
    %v1754 = vshrl.u32 %v1753, 7
    %v1755 = vsub.s32 %v1752, %v1754
    %v1756 = vrot.slane %v1746, %v1755
    %v1758 = vunpack.c.l.s4 842150450
    %v1759 = vunpack.c.0.s8 %v1758
    %v1760 = vlaneseq
    %v1761 = vshrl.u32 %v1760, 7
    %v1762 = vsub.s32 %v1759, %v1761
    %v1763 = vrot.slane %v1746, %v1762
    %v1765 = vunpack.c.l.s4 1414812756
    %v1766 = vunpack.c.0.s8 %v1765
    %v1767 = vlaneseq
    %v1768 = vshrl.u32 %v1767, 7
    %v1769 = vsub.s32 %v1766, %v1768
    %v1770 = vrot.slane %v1746, %v1769
    %v1772 = vunpack.c.l.s4 1987475062
    %v1773 = vunpack.c.0.s8 %v1772
    %v1774 = vlaneseq
    %v1775 = vshrl.u32 %v1774, 7
    %v1776 = vsub.s32 %v1773, %v1775
    %v1777 = vrot.slane %v1746, %v1776
    %v1779 = vunpack.c.l.s4 269488144
    %v1780 = vunpack.c.0.s8 %v1779
    %v1781 = vlaneseq
    %v1782 = vshrl.u32 %v1781, 7
    %v1783 = vsub.s32 %v1780, %v1782
    %v1784 = vrot.slane %v1747, %v1783
    %v1786 = vunpack.c.l.s4 842150450
    %v1787 = vunpack.c.0.s8 %v1786
    %v1788 = vlaneseq
    %v1789 = vshrl.u32 %v1788, 7
    %v1790 = vsub.s32 %v1787, %v1789
    %v1791 = vrot.slane %v1747, %v1790
    %v1793 = vunpack.c.l.s4 1414812756
    %v1794 = vunpack.c.0.s8 %v1793
    %v1795 = vlaneseq
    %v1796 = vshrl.u32 %v1795, 7
    %v1797 = vsub.s32 %v1794, %v1796
    %v1798 = vrot.slane %v1747, %v1797
    %v1800 = vunpack.c.l.s4 1987475062
    %v1801 = vunpack.c.0.s8 %v1800
    %v1802 = vlaneseq
    %v1803 = vshrl.u32 %v1802, 7
    %v1804 = vsub.s32 %v1801, %v1803
    %v1805 = vrot.slane %v1747, %v1804
    %v1814 = vmul.f32 %v1676, %v1756
    %v1815 = vmul.f32 %v1677, %v1763
    %v1816 = vmul.f32 %v1678, %v1770
    %v1817 = vmul.f32 %v1679, %v1777
    %v1818 = vmul.f32 %v1680, %v1784
    %v1819 = vmul.f32 %v1681, %v1791
    %v1820 = vmul.f32 %v1682, %v1798
    %v1821 = vmul.f32 %v1683, %v1805
    %v1822 = vlaneseq
    %v1823 = vshrl.u32 %v1822, 7
    %v1824 = vsub.s32 6, %v1823
    %v1825 = vrot.slane %v92, %v1824
    %v1827 = vcombine.high %v1825, %v1825
    %v1829 = vunpack.c.l.s4 1983009808
    %v1830 = vunpack.c.0.s8 %v1829
    %v1831 = vlaneseq
    %v1832 = vshrl.u32 %v1831, 7
    %v1833 = vsub.s32 %v1830, %v1832
    %v1834 = vrot.slane %v1825, %v1833
    %v1836 = vunpack.c.l.s4 1983009808
    %v1837 = vunpack.c.0.s8 %v1836
    %v1838 = vlaneseq
    %v1839 = vshrl.u32 %v1838, 7
    %v1840 = vsub.s32 %v1837, %v1839
    %v1841 = vrot.slane %v1827, %v1840
    %v1842 = vcombine.high %v1834, %v1834
    %v1843 = vcombine.high %v1841, %v1841
    %v1848 = vmul.f32 %v1814, %v1834
    %v1849 = vmul.f32 %v1815, %v1842
    %v1850 = vmul.f32 %v1816, %v1841
    %v1851 = vmul.f32 %v1817, %v1843
    %v1852 = vmul.f32 %v1818, %v1834
    %v1853 = vmul.f32 %v1819, %v1842
    %v1854 = vmul.f32 %v1820, %v1841
    %v1855 = vmul.f32 %v1821, %v1843
    %v1856 = vlaneseq
    %v1857 = vshrl.u32 %v1856, 7
    %v1858 = vsub.s32 7, %v1857
    %v1859 = vrot.slane %v92, %v1858
    %v1861 = vcombine.high %v1859, %v1859
    %v1863 = vunpack.c.l.s4 1983009808
    %v1864 = vunpack.c.0.s8 %v1863
    %v1865 = vlaneseq
    %v1866 = vshrl.u32 %v1865, 7
    %v1867 = vsub.s32 %v1864, %v1866
    %v1868 = vrot.slane %v1859, %v1867
    %v1870 = vunpack.c.l.s4 1983009808
    %v1871 = vunpack.c.0.s8 %v1870
    %v1872 = vlaneseq
    %v1873 = vshrl.u32 %v1872, 7
    %v1874 = vsub.s32 %v1871, %v1873
    %v1875 = vrot.slane %v1861, %v1874
    %v1876 = vcombine.high %v1868, %v1868
    %v1877 = vcombine.high %v1875, %v1875
    %v1882 = vadd.f32 %v1848, %v1868
    %v1883 = vadd.f32 %v1849, %v1876
    %v1884 = vadd.f32 %v1850, %v1875
    %v1885 = vadd.f32 %v1851, %v1877
    %v1886 = vadd.f32 %v1852, %v1868
    %v1887 = vadd.f32 %v1853, %v1876
    %v1888 = vadd.f32 %v1854, %v1875
    %v1889 = vadd.f32 %v1855, %v1877
    %vm1890 = vcmask 254976
    %1891 = vst.msk [vmem:[#allocation8] sm:$0x3] %vm1890, %v1882
    %1892 = vst.msk [vmem:[#allocation8 + $0x2] sm:$0x3] %vm1890, %v1883
    %1893 = vst.msk [vmem:[#allocation8 + $0x4] sm:$0x3] %vm1890, %v1884
    %1894 = vst.msk [vmem:[#allocation8 + $0x6] sm:$0x3] %vm1890, %v1885
    %1895 = vst.msk [vmem:[#allocation8 + $0x8] sm:$0x3] %vm1890, %v1886
    %1896 = vst.msk [vmem:[#allocation8 + $0xa] sm:$0x3] %vm1890, %v1887
    %1897 = vst.msk [vmem:[#allocation8 + $0xc] sm:$0x3] %vm1890, %v1888
    %1898 = vst.msk [vmem:[#allocation8 + $0xe] sm:$0x3] %vm1890, %v1889
    // Predicated region
    $region26: #{transformer_encoder_layer.1} parent=1 // pred_check
      _
    $region27: #{transformer_encoder_layer.1} parent=1 // pred_check_branch
      %1900 = sbr.rel (0) target = $region29
    $region28: #{transformer_encoder_layer.1} parent=1 // pred_region
      %s1902 = ssub.s32 256, 256
      %1903 = vsyncadd [#allocation4], %s1902
      %s1904 = sshll.u32 [#allocation8], 4
      %s1905 = int_to_ptr.vmem [resolvable:$true] %s1904
      %1910 = dma.vmem_to_hbm [thread:$0]  %s1905, 256, %s3, [#allocation4], 32, 32, 2
    $region29: #{transformer_encoder_layer.1} parent=1 // pred_fallthru
      _
    // Predicated region
    $region30: #{transformer_encoder_layer.1} parent=1 // pred_check
      _
    $region31: #{transformer_encoder_layer.1} parent=1 // pred_check_branch
      %1912 = sbr.rel (0) target = $region33
    $region32: #{transformer_encoder_layer.1} parent=1 // pred_region
      %1913 = dma.done [#allocation4], 256
    $region33: #{transformer_encoder_layer.1} parent=1 // pred_fallthru
      _
    %1914 = vsyncpa [#allocation3], 1
    %1915 = vsyncpa [#allocation6], 1
    %1916 = vsyncpa [#allocation4], 1

</llo_original>
